<compile_context>
chip_gen: v7x
topology: tpu7x:2x2x1
jax: 0.10.0
libtpu: 0.0.40
codegen_flags: <defaults>
</compile_context>

<pallas_src>
import jax
import jax.numpy as jnp
import numpy as np
from jax.experimental import pallas as pl
from jax.experimental.pallas import tpu as pltpu


def _gelu_tanh(x):
    # TODO(synk): PyTorch nn.GELU() defaults to the exact erf form; the tanh
    # approximation is used here (erf lowering on Mosaic is not guaranteed).
    c = 0.7978845608028654  # sqrt(2/pi)
    return 0.5 * x * (1.0 + jnp.tanh(c * (x + 0.044715 * x * x * x)))


def _layer_norm(x, gamma, beta, eps=1e-5):
    mean = jnp.mean(x, axis=-1, keepdims=True)
    var = jnp.mean((x - mean) ** 2, axis=-1, keepdims=True)
    return (x - mean) * jax.lax.rsqrt(var + eps) * gamma + beta


def _make_kernel(n_heads, d_k, mask_k, apply_pos):
    scale = 1.0 / float(np.sqrt(d_k))

    def kernel(q_ref, k_ref, v_ref,
               wk_ref, bk_ref, wv_ref, bv_ref, wo_ref, bo_ref,
               ng_ref,
               ln1g_ref, ln1b_ref, w1_ref, b1_ref, w2_ref, b2_ref,
               ln2g_ref, ln2b_ref,
               out_ref, attn_ref, concat_scr):
        S = q_ref.shape[1]

        xq = q_ref[0]          # (S, D) — this batch item
        xk = k_ref[0]
        xv = v_ref[0]
        wk = wk_ref[...]
        wv = wv_ref[...]

        # Projections (kq_same=True in the module: query reuses the key projection).
        qp = jnp.dot(xq, wk, preferred_element_type=jnp.float32) + bk_ref[...]
        kp = jnp.dot(xk, wk, preferred_element_type=jnp.float32) + bk_ref[...]
        vp = jnp.dot(xv, wv, preferred_element_type=jnp.float32) + bv_ref[...]

        # Masks / distance matrices from 2-D iota (mask_k is a static Python int,
        # mirroring np.triu(..., k=mask) in the PyTorch forward).
        row = jax.lax.broadcasted_iota(jnp.int32, (S, S), 0)
        col = jax.lax.broadcasted_iota(jnp.int32, (S, S), 1)
        if mask_k in (0, 1):
            allowed = (col - row) < mask_k       # True = may attend
        else:
            allowed = col >= 0                   # BERT-style all-True mask
        allowed_f = allowed.astype(jnp.float32)
        pos_eff = jnp.abs((col - row).astype(jnp.float32))
        cum_mat = (row <= col).astype(jnp.float32)   # cumsum along last axis via MXU

        neg_big = jnp.float32(-1e32)

        for h in range(n_heads):
            sl = slice(h * d_k, (h + 1) * d_k)
            qh = qp[:, sl]
            kh = kp[:, sl]
            vh = vp[:, sl]

            # scores = q @ k^T / sqrt(d_k)
            s = jax.lax.dot_general(
                qh, kh, (((1,), (1,)), ((), ())),
                preferred_element_type=jnp.float32) * scale        # (S, S)

            # First ("detached") softmax used to build the distance decay.
            s_m = jnp.where(allowed, s, neg_big)
            m1 = jnp.max(s_m, axis=-1, keepdims=True)
            e1 = jnp.exp(s_m - m1)
            p1 = e1 / jnp.sum(e1, axis=-1, keepdims=True)
            p1 = p1 * allowed_f

            distcum = jnp.dot(p1, cum_mat, preferred_element_type=jnp.float32)
            disttotal = jnp.sum(p1, axis=-1, keepdims=True)
            dist = jnp.sqrt(jnp.maximum((disttotal - distcum) * pos_eff, 0.0))

            g = ng_ref[0, h]                     # precomputed -softplus(gamma_h), SMEM scalar
            total_effect = jnp.clip(jnp.exp(dist * g), 1e-5, 1e5)

            # Second softmax on decayed scores.
            s2 = jnp.where(allowed, s * total_effect, neg_big)
            m2 = jnp.max(s2, axis=-1, keepdims=True)
            e2 = jnp.exp(s2 - m2)
            attn_h = e2 / jnp.sum(e2, axis=-1, keepdims=True)

            attn_ref[0, h, :, :] = attn_h
            concat_scr[:, sl] = jnp.dot(attn_h, vh, preferred_element_type=jnp.float32)

        concat = concat_scr[...]
        attn_out = jnp.dot(concat, wo_ref[...],
                           preferred_element_type=jnp.float32) + bo_ref[...]

        # Residual + LayerNorm 1.
        x = _layer_norm(xq + attn_out, ln1g_ref[...], ln1b_ref[...])

        if apply_pos:
            h1 = _gelu_tanh(jnp.dot(x, w1_ref[...],
                                    preferred_element_type=jnp.float32) + b1_ref[...])
            ffn = jnp.dot(h1, w2_ref[...],
                          preferred_element_type=jnp.float32) + b2_ref[...]
            x = _layer_norm(x + ffn, ln2g_ref[...], ln2b_ref[...])

        out_ref[0] = x

    return kernel


def cl4kt_transformer_layer(mask, query, key, values, params, apply_pos=True):
    B, S, D = query.shape
    H = params["n_heads"]
    d_k = D // H
    d_ff = params["w1"].shape[1]

    # -softplus(gammas), per head (tiny glue computation, lives in SMEM).
    neg_gamma = -jax.nn.softplus(params["gammas"].reshape(1, H)).astype(jnp.float32)

    kernel = _make_kernel(H, d_k, mask, apply_pos)

    def const_spec(shape):
        zeros = (0,) * len(shape)
        return pl.BlockSpec(shape, lambda b, _z=zeros: _z)

    seq_spec = pl.BlockSpec((1, S, D), lambda b: (b, 0, 0))

    in_specs = [
        seq_spec, seq_spec, seq_spec,
        const_spec((D, D)), const_spec((1, D)),      # wk, bk
        const_spec((D, D)), const_spec((1, D)),      # wv, bv
        const_spec((D, D)), const_spec((1, D)),      # wo, bo
        pl.BlockSpec(memory_space=pltpu.MemorySpace.SMEM),   # neg_gamma (per-head scalars)
        const_spec((1, D)), const_spec((1, D)),      # ln1 gamma/beta
        const_spec((D, d_ff)), const_spec((1, d_ff)),  # linear1
        const_spec((d_ff, D)), const_spec((1, D)),     # linear2
        const_spec((1, D)), const_spec((1, D)),      # ln2 gamma/beta
    ]
    out_specs = [
        pl.BlockSpec((1, S, D), lambda b: (b, 0, 0)),
        pl.BlockSpec((1, H, S, S), lambda b: (b, 0, 0, 0)),
    ]

    grid_spec = pltpu.PrefetchScalarGridSpec(
        num_scalar_prefetch=0,
        grid=(B,),
        in_specs=in_specs,
        out_specs=out_specs,
        scratch_shapes=[pltpu.VMEM((S, D), jnp.float32)],
    )

    out, attn = pl.pallas_call(
        kernel,
        out_shape=(jax.ShapeDtypeStruct((B, S, D), jnp.float32),
                   jax.ShapeDtypeStruct((B, H, S, S), jnp.float32)),
        grid_spec=grid_spec,
        compiler_params=pltpu.CompilerParams(
            dimension_semantics=("parallel",)),
    )(query, key, values,
      params["wk"], params["bk"].reshape(1, D),
      params["wv"], params["bv"].reshape(1, D),
      params["wo"], params["bo"].reshape(1, D),
      neg_gamma,
      params["ln1_g"].reshape(1, D), params["ln1_b"].reshape(1, D),
      params["w1"], params["b1"].reshape(1, d_ff),
      params["w2"], params["b2"].reshape(1, D),
      params["ln2_g"].reshape(1, D), params["ln2_b"].reshape(1, D))
    return out, attn


def reference(mask, query, key, values, params, apply_pos=True):
    """Pure-JAX mirror of the PyTorch forward (inference: dropout = identity)."""
    HI = jax.lax.Precision.HIGHEST
    B, S, D = query.shape
    H = params["n_heads"]
    dk = D // H

    def linear(x, w, b):
        return jnp.dot(x, w, precision=HI) + b

    qp = linear(query, params["wk"], params["bk"])   # kq_same=True
    kp = linear(key, params["wk"], params["bk"])
    vp = linear(values, params["wv"], params["bv"])

    def split(x):
        return x.reshape(B, S, H, dk).transpose(0, 2, 1, 3)

    qh, kh, vh = split(qp), split(kp), split(vp)
    scores = jnp.einsum("bhid,bhjd->bhij", qh, kh, precision=HI) / np.sqrt(dk)

    row = jnp.arange(S)[:, None]
    col = jnp.arange(S)[None, :]
    if mask in (0, 1):
        allowed = (col - row) < mask
    else:
        allowed = jnp.ones((S, S), dtype=bool)
    allowed4 = allowed[None, None, :, :]
    pos_eff = jnp.abs((col - row).astype(jnp.float32))[None, None, :, :]

    s_ = jnp.where(allowed4, scores, -1e32)
    p1 = jax.nn.softmax(s_, axis=-1) * allowed4.astype(jnp.float32)
    distcum = jnp.cumsum(p1, axis=-1)
    disttotal = jnp.sum(p1, axis=-1, keepdims=True)
    dist = jnp.sqrt(jnp.maximum((disttotal - distcum) * pos_eff, 0.0))
    neg_gamma = -jax.nn.softplus(params["gammas"]).reshape(1, H, 1, 1)
    total_effect = jnp.clip(jnp.exp(dist * neg_gamma), 1e-5, 1e5)
    scores = jnp.where(allowed4, scores * total_effect, -1e32)
    attn = jax.nn.softmax(scores, axis=-1)

    out = jnp.einsum("bhij,bhjd->bhid", attn, vh, precision=HI)
    concat = out.transpose(0, 2, 1, 3).reshape(B, S, D)
    attn_out = linear(concat, params["wo"], params["bo"])

    x = _layer_norm(query + attn_out, params["ln1_g"], params["ln1_b"])
    if apply_pos:
        h1 = _gelu_tanh(linear(x, params["w1"], params["b1"]))
        x = _layer_norm(x + linear(h1, params["w2"], params["b2"]),
                        params["ln2_g"], params["ln2_b"])
    return x, attn


if __name__ == "__main__":
    d_model = 32
    n_heads = 2
    d_ff = 64
    seq_len = 8
    batch = 2
    mask = 1   # causal incl. diagonal (question/knowledge encoder mode)

    rng = jax.random.PRNGKey(0)
    ks = jax.random.split(rng, 16)

    def init(k, shape, scale):
        return (scale * jax.random.normal(k, shape)).astype(jnp.float32)

    params = {
        "n_heads": n_heads,
        "wk": init(ks[0], (d_model, d_model), 1.0 / np.sqrt(d_model)),
        "bk": jnp.zeros((d_model,), jnp.float32),
        "wv": init(ks[1], (d_model, d_model), 1.0 / np.sqrt(d_model)),
        "bv": jnp.zeros((d_model,), jnp.float32),
        "wo": init(ks[2], (d_model, d_model), 1.0 / np.sqrt(d_model)),
        "bo": jnp.zeros((d_model,), jnp.float32),
        "gammas": init(ks[3], (n_heads, 1, 1), 0.5),
        "ln1_g": 1.0 + init(ks[4], (d_model,), 0.1),
        "ln1_b": init(ks[5], (d_model,), 0.1),
        "w1": init(ks[6], (d_model, d_ff), 1.0 / np.sqrt(d_model)),
        "b1": init(ks[7], (d_ff,), 0.1),
        "w2": init(ks[8], (d_ff, d_model), 1.0 / np.sqrt(d_ff)),
        "b2": init(ks[9], (d_model,), 0.1),
        "ln2_g": 1.0 + init(ks[10], (d_model,), 0.1),
        "ln2_b": init(ks[11], (d_model,), 0.1),
    }

    query = init(ks[12], (batch, seq_len, d_model), 1.0)
    key_in = init(ks[13], (batch, seq_len, d_model), 1.0)
    values = init(ks[14], (batch, seq_len, d_model), 1.0)

    out, attn = cl4kt_transformer_layer(mask, query, key_in, values, params)
    out = jax.block_until_ready(out)
    attn = jax.block_until_ready(attn)

    ref_out, ref_attn = reference(mask, query, key_in, values, params)

    assert out.shape == (batch, seq_len, d_model)
    assert attn.shape == (batch, n_heads, seq_len, seq_len)
    assert jnp.allclose(out, ref_out, atol=1e-4, rtol=1e-4), \
        float(jnp.max(jnp.abs(out - ref_out)))
    assert jnp.allclose(attn, ref_attn, atol=1e-4, rtol=1e-4), \
        float(jnp.max(jnp.abs(attn - ref_attn)))

    print("KERNEL_OK")
</pallas_src>

<mosaic_0001>
module attributes {stable_mosaic.version = 11 : i64} {
  func.func @kernel(%arg0: i32, %arg1: memref<1x8x32xf32, #tpu.memory_space<vmem>>, %arg2: memref<1x8x32xf32, #tpu.memory_space<vmem>>, %arg3: memref<1x8x32xf32, #tpu.memory_space<vmem>>, %arg4: memref<32x32xf32, #tpu.memory_space<vmem>>, %arg5: memref<1x32xf32, #tpu.memory_space<vmem>>, %arg6: memref<32x32xf32, #tpu.memory_space<vmem>>, %arg7: memref<1x32xf32, #tpu.memory_space<vmem>>, %arg8: memref<32x32xf32, #tpu.memory_space<vmem>>, %arg9: memref<1x32xf32, #tpu.memory_space<vmem>>, %arg10: memref<1x2xf32, #tpu.memory_space<smem>>, %arg11: memref<1x32xf32, #tpu.memory_space<vmem>>, %arg12: memref<1x32xf32, #tpu.memory_space<vmem>>, %arg13: memref<32x64xf32, #tpu.memory_space<vmem>>, %arg14: memref<1x64xf32, #tpu.memory_space<vmem>>, %arg15: memref<64x32xf32, #tpu.memory_space<vmem>>, %arg16: memref<1x32xf32, #tpu.memory_space<vmem>>, %arg17: memref<1x32xf32, #tpu.memory_space<vmem>>, %arg18: memref<1x32xf32, #tpu.memory_space<vmem>>, %arg19: memref<1x8x32xf32, #tpu.memory_space<vmem>>, %arg20: memref<1x2x8x8xf32, #tpu.memory_space<vmem>>, %arg21: memref<8x32xf32, #tpu.memory_space<vmem>>) attributes {dimension_semantics = [#tpu.dimension_semantics<parallel>], iteration_bounds = array<i64: 2>, scalar_prefetch = 0 : i64, scratch_operands = 1 : i64, tpu.core_type = #tpu.core_type<tc>, window_params = [{transform_indices = @transform_0, window_bounds = array<i64: 1, 8, 32>}, {transform_indices = @transform_1, window_bounds = array<i64: 1, 8, 32>}, {transform_indices = @transform_2, window_bounds = array<i64: 1, 8, 32>}, {pipeline_mode = #tpu.pipeline_mode<synchronous>, transform_indices = @transform_3, window_bounds = array<i64: 32, 32>}, {pipeline_mode = #tpu.pipeline_mode<synchronous>, transform_indices = @transform_4, window_bounds = array<i64: 1, 32>}, {pipeline_mode = #tpu.pipeline_mode<synchronous>, transform_indices = @transform_5, window_bounds = array<i64: 32, 32>}, {pipeline_mode = #tpu.pipeline_mode<synchronous>, transform_indices = @transform_6, window_bounds = array<i64: 1, 32>}, {pipeline_mode = #tpu.pipeline_mode<synchronous>, transform_indices = @transform_7, window_bounds = array<i64: 32, 32>}, {pipeline_mode = #tpu.pipeline_mode<synchronous>, transform_indices = @transform_8, window_bounds = array<i64: 1, 32>}, {transform_indices = @transform_9, window_bounds = array<i64: 1, 2>}, {pipeline_mode = #tpu.pipeline_mode<synchronous>, transform_indices = @transform_10, window_bounds = array<i64: 1, 32>}, {pipeline_mode = #tpu.pipeline_mode<synchronous>, transform_indices = @transform_11, window_bounds = array<i64: 1, 32>}, {pipeline_mode = #tpu.pipeline_mode<synchronous>, transform_indices = @transform_12, window_bounds = array<i64: 32, 64>}, {pipeline_mode = #tpu.pipeline_mode<synchronous>, transform_indices = @transform_13, window_bounds = array<i64: 1, 64>}, {pipeline_mode = #tpu.pipeline_mode<synchronous>, transform_indices = @transform_14, window_bounds = array<i64: 64, 32>}, {pipeline_mode = #tpu.pipeline_mode<synchronous>, transform_indices = @transform_15, window_bounds = array<i64: 1, 32>}, {pipeline_mode = #tpu.pipeline_mode<synchronous>, transform_indices = @transform_16, window_bounds = array<i64: 1, 32>}, {pipeline_mode = #tpu.pipeline_mode<synchronous>, transform_indices = @transform_17, window_bounds = array<i64: 1, 32>}, {transform_indices = @transform_18, window_bounds = array<i64: 1, 8, 32>}, {transform_indices = @transform_19, window_bounds = array<i64: 1, 2, 8, 8>}]} {
    %c0 = arith.constant 0 : index
    %c0_0 = arith.constant 0 : index
    %c0_1 = arith.constant 0 : index
    %0 = vector.load %arg1[%c0, %c0_0, %c0_1] : memref<1x8x32xf32, #tpu.memory_space<vmem>>, vector<1x8x32xf32>
    %1 = vector.shape_cast %0 : vector<1x8x32xf32> to vector<8x32xf32>
    %c0_2 = arith.constant 0 : index
    %c0_3 = arith.constant 0 : index
    %c0_4 = arith.constant 0 : index
    %2 = vector.load %arg2[%c0_2, %c0_3, %c0_4] : memref<1x8x32xf32, #tpu.memory_space<vmem>>, vector<1x8x32xf32>
    %3 = vector.shape_cast %2 : vector<1x8x32xf32> to vector<8x32xf32>
    %c0_5 = arith.constant 0 : index
    %c0_6 = arith.constant 0 : index
    %c0_7 = arith.constant 0 : index
    %4 = vector.load %arg3[%c0_5, %c0_6, %c0_7] : memref<1x8x32xf32, #tpu.memory_space<vmem>>, vector<1x8x32xf32>
    %5 = vector.shape_cast %4 : vector<1x8x32xf32> to vector<8x32xf32>
    %c0_8 = arith.constant 0 : index
    %c0_9 = arith.constant 0 : index
    %6 = vector.load %arg4[%c0_8, %c0_9] : memref<32x32xf32, #tpu.memory_space<vmem>>, vector<32x32xf32>
    %c0_10 = arith.constant 0 : index
    %c0_11 = arith.constant 0 : index
    %7 = vector.load %arg6[%c0_10, %c0_11] : memref<32x32xf32, #tpu.memory_space<vmem>>, vector<32x32xf32>
    %cst = arith.constant dense<0.000000e+00> : vector<8x32xf32>
    %8 = tpu.matmul %1, %6, %cst {dimension_numbers = #tpu.dot_dimension_numbers<[1], [0], [0], [1], [0, 0, 1, 1], [], []>} : vector<8x32xf32>, vector<32x32xf32>, vector<8x32xf32> -> vector<8x32xf32>
    %c0_12 = arith.constant 0 : index
    %c0_13 = arith.constant 0 : index
    %9 = vector.load %arg5[%c0_12, %c0_13] : memref<1x32xf32, #tpu.memory_space<vmem>>, vector<1x32xf32>
    %10 = vector.broadcast %9 : vector<1x32xf32> to vector<8x32xf32>
    %11 = arith.addf %8, %10 : vector<8x32xf32>
    %cst_14 = arith.constant dense<0.000000e+00> : vector<8x32xf32>
    %12 = tpu.matmul %3, %6, %cst_14 {dimension_numbers = #tpu.dot_dimension_numbers<[1], [0], [0], [1], [0, 0, 1, 1], [], []>} : vector<8x32xf32>, vector<32x32xf32>, vector<8x32xf32> -> vector<8x32xf32>
    %c0_15 = arith.constant 0 : index
    %c0_16 = arith.constant 0 : index
    %13 = vector.load %arg5[%c0_15, %c0_16] : memref<1x32xf32, #tpu.memory_space<vmem>>, vector<1x32xf32>
    %14 = vector.broadcast %13 : vector<1x32xf32> to vector<8x32xf32>
    %15 = arith.addf %12, %14 : vector<8x32xf32>
    %cst_17 = arith.constant dense<0.000000e+00> : vector<8x32xf32>
    %16 = tpu.matmul %5, %7, %cst_17 {dimension_numbers = #tpu.dot_dimension_numbers<[1], [0], [0], [1], [0, 0, 1, 1], [], []>} : vector<8x32xf32>, vector<32x32xf32>, vector<8x32xf32> -> vector<8x32xf32>
    %c0_18 = arith.constant 0 : index
    %c0_19 = arith.constant 0 : index
    %17 = vector.load %arg7[%c0_18, %c0_19] : memref<1x32xf32, #tpu.memory_space<vmem>>, vector<1x32xf32>
    %18 = vector.broadcast %17 : vector<1x32xf32> to vector<8x32xf32>
    %19 = arith.addf %16, %18 : vector<8x32xf32>
    %20 = tpu.iota {dimensions = array<i32: 0>} : vector<8x8xi32>
    %21 = tpu.iota {dimensions = array<i32: 1>} : vector<8x8xi32>
    %22 = arith.subi %21, %20 : vector<8x8xi32>
    %c1_i32 = arith.constant 1 : i32
    %23 = vector.broadcast %c1_i32 : i32 to vector<8x8xi32>
    %24 = arith.cmpi slt, %22, %23 : vector<8x8xi32>
    %25 = arith.extui %24 : vector<8x8xi1> to vector<8x8xi32>
    %26 = arith.sitofp %25 : vector<8x8xi32> to vector<8x8xf32>
    %27 = arith.subi %21, %20 : vector<8x8xi32>
    %28 = arith.sitofp %27 : vector<8x8xi32> to vector<8x8xf32>
    %29 = math.absf %28 : vector<8x8xf32>
    %30 = arith.cmpi sle, %20, %21 : vector<8x8xi32>
    %31 = arith.extui %30 : vector<8x8xi1> to vector<8x8xi32>
    %32 = arith.sitofp %31 : vector<8x8xi32> to vector<8x8xf32>
    %33 = vector.extract_strided_slice %11 {offsets = [0, 0], sizes = [8, 16], strides = [1, 1]} : vector<8x32xf32> to vector<8x16xf32>
    %34 = vector.extract_strided_slice %15 {offsets = [0, 0], sizes = [8, 16], strides = [1, 1]} : vector<8x32xf32> to vector<8x16xf32>
    %35 = vector.extract_strided_slice %19 {offsets = [0, 0], sizes = [8, 16], strides = [1, 1]} : vector<8x32xf32> to vector<8x16xf32>
    %cst_20 = arith.constant dense<0.000000e+00> : vector<8x8xf32>
    %36 = tpu.matmul %33, %34, %cst_20 {dimension_numbers = #tpu.dot_dimension_numbers<[1], [1], [0], [0], [0, 0, 1, 0], [], []>} : vector<8x16xf32>, vector<8x16xf32>, vector<8x8xf32> -> vector<8x8xf32>
    %cst_21 = arith.constant 2.500000e-01 : f32
    %37 = vector.broadcast %cst_21 : f32 to vector<8x8xf32>
    %38 = arith.mulf %36, %37 : vector<8x8xf32>
    %cst_22 = arith.constant -1.000000e+32 : f32
    %39 = vector.broadcast %cst_22 : f32 to vector<8x8xf32>
    %40 = arith.select %24, %38, %39 : vector<8x8xi1>, vector<8x8xf32>
    %cst_23 = arith.constant dense<0xFF800000> : vector<8xf32>
    %41 = vector.multi_reduction <maximumf>, %40, %cst_23 [1] : vector<8x8xf32> to vector<8xf32>
    %42 = vector.shape_cast %41 : vector<8xf32> to vector<8x1xf32>
    %43 = vector.broadcast %42 : vector<8x1xf32> to vector<8x8xf32>
    %44 = arith.subf %40, %43 : vector<8x8xf32>
    %45 = math.exp %44 : vector<8x8xf32>
    %cst_24 = arith.constant dense<0.000000e+00> : vector<8xf32>
    %46 = vector.multi_reduction <add>, %45, %cst_24 [1] : vector<8x8xf32> to vector<8xf32>
    %47 = vector.shape_cast %46 : vector<8xf32> to vector<8x1xf32>
    %48 = vector.broadcast %47 : vector<8x1xf32> to vector<8x8xf32>
    %49 = arith.divf %45, %48 : vector<8x8xf32>
    %50 = arith.mulf %49, %26 : vector<8x8xf32>
    %cst_25 = arith.constant dense<0.000000e+00> : vector<8x8xf32>
    %51 = tpu.matmul %50, %32, %cst_25 {dimension_numbers = #tpu.dot_dimension_numbers<[1], [0], [0], [1], [0, 0, 1, 1], [], []>} : vector<8x8xf32>, vector<8x8xf32>, vector<8x8xf32> -> vector<8x8xf32>
    %cst_26 = arith.constant dense<0.000000e+00> : vector<8xf32>
    %52 = vector.multi_reduction <add>, %50, %cst_26 [1] : vector<8x8xf32> to vector<8xf32>
    %53 = vector.shape_cast %52 : vector<8xf32> to vector<8x1xf32>
    %54 = vector.broadcast %53 : vector<8x1xf32> to vector<8x8xf32>
    %55 = arith.subf %54, %51 : vector<8x8xf32>
    %56 = arith.mulf %55, %29 : vector<8x8xf32>
    %cst_27 = arith.constant 0.000000e+00 : f32
    %57 = vector.broadcast %cst_27 : f32 to vector<8x8xf32>
    %58 = arith.maximumf %56, %57 : vector<8x8xf32>
    %59 = math.sqrt %58 : vector<8x8xf32>
    %c0_28 = arith.constant 0 : index
    %c0_29 = arith.constant 0 : index
    %60 = memref.load %arg10[%c0_28, %c0_29] : memref<1x2xf32, #tpu.memory_space<smem>>
    %61 = vector.broadcast %60 : f32 to vector<8x8xf32>
    %62 = arith.mulf %59, %61 : vector<8x8xf32>
    %63 = math.exp %62 : vector<8x8xf32>
    %cst_30 = arith.constant 9.99999974E-6 : f32
    %cst_31 = arith.constant 1.000000e+05 : f32
    %64 = vector.broadcast %cst_30 : f32 to vector<8x8xf32>
    %65 = arith.maximumf %64, %63 : vector<8x8xf32>
    %66 = vector.broadcast %cst_31 : f32 to vector<8x8xf32>
    %67 = arith.minimumf %66, %65 : vector<8x8xf32>
    %68 = arith.mulf %38, %67 : vector<8x8xf32>
    %cst_32 = arith.constant -1.000000e+32 : f32
    %69 = vector.broadcast %cst_32 : f32 to vector<8x8xf32>
    %70 = arith.select %24, %68, %69 : vector<8x8xi1>, vector<8x8xf32>
    %cst_33 = arith.constant dense<0xFF800000> : vector<8xf32>
    %71 = vector.multi_reduction <maximumf>, %70, %cst_33 [1] : vector<8x8xf32> to vector<8xf32>
    %72 = vector.shape_cast %71 : vector<8xf32> to vector<8x1xf32>
    %73 = vector.broadcast %72 : vector<8x1xf32> to vector<8x8xf32>
    %74 = arith.subf %70, %73 : vector<8x8xf32>
    %75 = math.exp %74 : vector<8x8xf32>
    %cst_34 = arith.constant dense<0.000000e+00> : vector<8xf32>
    %76 = vector.multi_reduction <add>, %75, %cst_34 [1] : vector<8x8xf32> to vector<8xf32>
    %77 = vector.shape_cast %76 : vector<8xf32> to vector<8x1xf32>
    %78 = vector.broadcast %77 : vector<8x1xf32> to vector<8x8xf32>
    %79 = arith.divf %75, %78 : vector<8x8xf32>
    %c0_35 = arith.constant 0 : index
    %c0_36 = arith.constant 0 : index
    %c0_37 = arith.constant 0 : index
    %c0_38 = arith.constant 0 : index
    %80 = vector.load %arg20[%c0_35, %c0_36, %c0_37, %c0_38] : memref<1x2x8x8xf32, #tpu.memory_space<vmem>>, vector<1x1x8x8xf32>
    %81 = vector.shape_cast %80 : vector<1x1x8x8xf32> to vector<8x8xf32>
    %82 = vector.shape_cast %79 : vector<8x8xf32> to vector<1x1x8x8xf32>
    tpu.vector_store %arg20[%c0_35, %c0_36, %c0_37, %c0_38], %82 {strides = array<i32>} : memref<1x2x8x8xf32, #tpu.memory_space<vmem>>, vector<1x1x8x8xf32>,
    %cst_39 = arith.constant dense<0.000000e+00> : vector<8x16xf32>
    %83 = tpu.matmul %79, %35, %cst_39 {dimension_numbers = #tpu.dot_dimension_numbers<[1], [0], [0], [1], [0, 0, 1, 1], [], []>} : vector<8x8xf32>, vector<8x16xf32>, vector<8x16xf32> -> vector<8x16xf32>
    %c0_40 = arith.constant 0 : index
    %c0_41 = arith.constant 0 : index
    %84 = vector.load %arg21[%c0_40, %c0_41] : memref<8x32xf32, #tpu.memory_space<vmem>>, vector<8x16xf32>
    tpu.vector_store %arg21[%c0_40, %c0_41], %83 {strides = array<i32>} : memref<8x32xf32, #tpu.memory_space<vmem>>, vector<8x16xf32>,
    %85 = vector.extract_strided_slice %11 {offsets = [0, 16], sizes = [8, 16], strides = [1, 1]} : vector<8x32xf32> to vector<8x16xf32>
    %86 = vector.extract_strided_slice %15 {offsets = [0, 16], sizes = [8, 16], strides = [1, 1]} : vector<8x32xf32> to vector<8x16xf32>
    %87 = vector.extract_strided_slice %19 {offsets = [0, 16], sizes = [8, 16], strides = [1, 1]} : vector<8x32xf32> to vector<8x16xf32>
    %cst_42 = arith.constant dense<0.000000e+00> : vector<8x8xf32>
    %88 = tpu.matmul %85, %86, %cst_42 {dimension_numbers = #tpu.dot_dimension_numbers<[1], [1], [0], [0], [0, 0, 1, 0], [], []>} : vector<8x16xf32>, vector<8x16xf32>, vector<8x8xf32> -> vector<8x8xf32>
    %cst_43 = arith.constant 2.500000e-01 : f32
    %89 = vector.broadcast %cst_43 : f32 to vector<8x8xf32>
    %90 = arith.mulf %88, %89 : vector<8x8xf32>
    %cst_44 = arith.constant -1.000000e+32 : f32
    %91 = vector.broadcast %cst_44 : f32 to vector<8x8xf32>
    %92 = arith.select %24, %90, %91 : vector<8x8xi1>, vector<8x8xf32>
    %cst_45 = arith.constant dense<0xFF800000> : vector<8xf32>
    %93 = vector.multi_reduction <maximumf>, %92, %cst_45 [1] : vector<8x8xf32> to vector<8xf32>
    %94 = vector.shape_cast %93 : vector<8xf32> to vector<8x1xf32>
    %95 = vector.broadcast %94 : vector<8x1xf32> to vector<8x8xf32>
    %96 = arith.subf %92, %95 : vector<8x8xf32>
    %97 = math.exp %96 : vector<8x8xf32>
    %cst_46 = arith.constant dense<0.000000e+00> : vector<8xf32>
    %98 = vector.multi_reduction <add>, %97, %cst_46 [1] : vector<8x8xf32> to vector<8xf32>
    %99 = vector.shape_cast %98 : vector<8xf32> to vector<8x1xf32>
    %100 = vector.broadcast %99 : vector<8x1xf32> to vector<8x8xf32>
    %101 = arith.divf %97, %100 : vector<8x8xf32>
    %102 = arith.mulf %101, %26 : vector<8x8xf32>
    %cst_47 = arith.constant dense<0.000000e+00> : vector<8x8xf32>
    %103 = tpu.matmul %102, %32, %cst_47 {dimension_numbers = #tpu.dot_dimension_numbers<[1], [0], [0], [1], [0, 0, 1, 1], [], []>} : vector<8x8xf32>, vector<8x8xf32>, vector<8x8xf32> -> vector<8x8xf32>
    %cst_48 = arith.constant dense<0.000000e+00> : vector<8xf32>
    %104 = vector.multi_reduction <add>, %102, %cst_48 [1] : vector<8x8xf32> to vector<8xf32>
    %105 = vector.shape_cast %104 : vector<8xf32> to vector<8x1xf32>
    %106 = vector.broadcast %105 : vector<8x1xf32> to vector<8x8xf32>
    %107 = arith.subf %106, %103 : vector<8x8xf32>
    %108 = arith.mulf %107, %29 : vector<8x8xf32>
    %cst_49 = arith.constant 0.000000e+00 : f32
    %109 = vector.broadcast %cst_49 : f32 to vector<8x8xf32>
    %110 = arith.maximumf %108, %109 : vector<8x8xf32>
    %111 = math.sqrt %110 : vector<8x8xf32>
    %c0_50 = arith.constant 0 : index
    %c1 = arith.constant 1 : index
    %112 = memref.load %arg10[%c0_50, %c1] : memref<1x2xf32, #tpu.memory_space<smem>>
    %113 = vector.broadcast %112 : f32 to vector<8x8xf32>
    %114 = arith.mulf %111, %113 : vector<8x8xf32>
    %115 = math.exp %114 : vector<8x8xf32>
    %cst_51 = arith.constant 9.99999974E-6 : f32
    %cst_52 = arith.constant 1.000000e+05 : f32
    %116 = vector.broadcast %cst_51 : f32 to vector<8x8xf32>
    %117 = arith.maximumf %116, %115 : vector<8x8xf32>
    %118 = vector.broadcast %cst_52 : f32 to vector<8x8xf32>
    %119 = arith.minimumf %118, %117 : vector<8x8xf32>
    %120 = arith.mulf %90, %119 : vector<8x8xf32>
    %cst_53 = arith.constant -1.000000e+32 : f32
    %121 = vector.broadcast %cst_53 : f32 to vector<8x8xf32>
    %122 = arith.select %24, %120, %121 : vector<8x8xi1>, vector<8x8xf32>
    %cst_54 = arith.constant dense<0xFF800000> : vector<8xf32>
    %123 = vector.multi_reduction <maximumf>, %122, %cst_54 [1] : vector<8x8xf32> to vector<8xf32>
    %124 = vector.shape_cast %123 : vector<8xf32> to vector<8x1xf32>
    %125 = vector.broadcast %124 : vector<8x1xf32> to vector<8x8xf32>
    %126 = arith.subf %122, %125 : vector<8x8xf32>
    %127 = math.exp %126 : vector<8x8xf32>
    %cst_55 = arith.constant dense<0.000000e+00> : vector<8xf32>
    %128 = vector.multi_reduction <add>, %127, %cst_55 [1] : vector<8x8xf32> to vector<8xf32>
    %129 = vector.shape_cast %128 : vector<8xf32> to vector<8x1xf32>
    %130 = vector.broadcast %129 : vector<8x1xf32> to vector<8x8xf32>
    %131 = arith.divf %127, %130 : vector<8x8xf32>
    %c0_56 = arith.constant 0 : index
    %c1_57 = arith.constant 1 : index
    %c0_58 = arith.constant 0 : index
    %c0_59 = arith.constant 0 : index
    %132 = vector.load %arg20[%c0_56, %c1_57, %c0_58, %c0_59] : memref<1x2x8x8xf32, #tpu.memory_space<vmem>>, vector<1x1x8x8xf32>
    %133 = vector.shape_cast %132 : vector<1x1x8x8xf32> to vector<8x8xf32>
    %134 = vector.shape_cast %131 : vector<8x8xf32> to vector<1x1x8x8xf32>
    tpu.vector_store %arg20[%c0_56, %c1_57, %c0_58, %c0_59], %134 {strides = array<i32>} : memref<1x2x8x8xf32, #tpu.memory_space<vmem>>, vector<1x1x8x8xf32>,
    %cst_60 = arith.constant dense<0.000000e+00> : vector<8x16xf32>
    %135 = tpu.matmul %131, %87, %cst_60 {dimension_numbers = #tpu.dot_dimension_numbers<[1], [0], [0], [1], [0, 0, 1, 1], [], []>} : vector<8x8xf32>, vector<8x16xf32>, vector<8x16xf32> -> vector<8x16xf32>
    %c0_61 = arith.constant 0 : index
    %c16 = arith.constant 16 : index
    %136 = vector.load %arg21[%c0_61, %c16] : memref<8x32xf32, #tpu.memory_space<vmem>>, vector<8x16xf32>
    tpu.vector_store %arg21[%c0_61, %c16], %135 {strides = array<i32>} : memref<8x32xf32, #tpu.memory_space<vmem>>, vector<8x16xf32>,
    %c0_62 = arith.constant 0 : index
    %c0_63 = arith.constant 0 : index
    %137 = vector.load %arg21[%c0_62, %c0_63] : memref<8x32xf32, #tpu.memory_space<vmem>>, vector<8x32xf32>
    %c0_64 = arith.constant 0 : index
    %c0_65 = arith.constant 0 : index
    %138 = vector.load %arg8[%c0_64, %c0_65] : memref<32x32xf32, #tpu.memory_space<vmem>>, vector<32x32xf32>
    %cst_66 = arith.constant dense<0.000000e+00> : vector<8x32xf32>
    %139 = tpu.matmul %137, %138, %cst_66 {dimension_numbers = #tpu.dot_dimension_numbers<[1], [0], [0], [1], [0, 0, 1, 1], [], []>} : vector<8x32xf32>, vector<32x32xf32>, vector<8x32xf32> -> vector<8x32xf32>
    %c0_67 = arith.constant 0 : index
    %c0_68 = arith.constant 0 : index
    %140 = vector.load %arg9[%c0_67, %c0_68] : memref<1x32xf32, #tpu.memory_space<vmem>>, vector<1x32xf32>
    %141 = vector.broadcast %140 : vector<1x32xf32> to vector<8x32xf32>
    %142 = arith.addf %139, %141 : vector<8x32xf32>
    %143 = arith.addf %1, %142 : vector<8x32xf32>
    %c0_69 = arith.constant 0 : index
    %c0_70 = arith.constant 0 : index
    %144 = vector.load %arg11[%c0_69, %c0_70] : memref<1x32xf32, #tpu.memory_space<vmem>>, vector<1x32xf32>
    %c0_71 = arith.constant 0 : index
    %c0_72 = arith.constant 0 : index
    %145 = vector.load %arg12[%c0_71, %c0_72] : memref<1x32xf32, #tpu.memory_space<vmem>>, vector<1x32xf32>
    %cst_73 = arith.constant dense<0.000000e+00> : vector<8xf32>
    %146 = vector.multi_reduction <add>, %143, %cst_73 [1] : vector<8x32xf32> to vector<8xf32>
    %147 = vector.shape_cast %146 : vector<8xf32> to vector<8x1xf32>
    %cst_74 = arith.constant 3.200000e+01 : f32
    %148 = vector.broadcast %cst_74 : f32 to vector<8x1xf32>
    %149 = arith.divf %147, %148 : vector<8x1xf32>
    %150 = vector.broadcast %149 : vector<8x1xf32> to vector<8x32xf32>
    %151 = arith.subf %143, %150 : vector<8x32xf32>
    %152 = arith.mulf %151, %151 : vector<8x32xf32>
    %cst_75 = arith.constant dense<0.000000e+00> : vector<8xf32>
    %153 = vector.multi_reduction <add>, %152, %cst_75 [1] : vector<8x32xf32> to vector<8xf32>
    %154 = vector.shape_cast %153 : vector<8xf32> to vector<8x1xf32>
    %cst_76 = arith.constant 3.200000e+01 : f32
    %155 = vector.broadcast %cst_76 : f32 to vector<8x1xf32>
    %156 = arith.divf %154, %155 : vector<8x1xf32>
    %157 = vector.broadcast %149 : vector<8x1xf32> to vector<8x32xf32>
    %158 = arith.subf %143, %157 : vector<8x32xf32>
    %cst_77 = arith.constant 9.99999974E-6 : f32
    %159 = vector.broadcast %cst_77 : f32 to vector<8x1xf32>
    %160 = arith.addf %156, %159 : vector<8x1xf32>
    %161 = math.rsqrt %160 : vector<8x1xf32>
    %162 = vector.broadcast %161 : vector<8x1xf32> to vector<8x32xf32>
    %163 = arith.mulf %158, %162 : vector<8x32xf32>
    %164 = vector.broadcast %144 : vector<1x32xf32> to vector<8x32xf32>
    %165 = arith.mulf %163, %164 : vector<8x32xf32>
    %166 = vector.broadcast %145 : vector<1x32xf32> to vector<8x32xf32>
    %167 = arith.addf %165, %166 : vector<8x32xf32>
    %c0_78 = arith.constant 0 : index
    %c0_79 = arith.constant 0 : index
    %168 = vector.load %arg13[%c0_78, %c0_79] : memref<32x64xf32, #tpu.memory_space<vmem>>, vector<32x64xf32>
    %cst_80 = arith.constant dense<0.000000e+00> : vector<8x64xf32>
    %169 = tpu.matmul %167, %168, %cst_80 {dimension_numbers = #tpu.dot_dimension_numbers<[1], [0], [0], [1], [0, 0, 1, 1], [], []>} : vector<8x32xf32>, vector<32x64xf32>, vector<8x64xf32> -> vector<8x64xf32>
    %c0_81 = arith.constant 0 : index
    %c0_82 = arith.constant 0 : index
    %170 = vector.load %arg14[%c0_81, %c0_82] : memref<1x64xf32, #tpu.memory_space<vmem>>, vector<1x64xf32>
    %171 = vector.broadcast %170 : vector<1x64xf32> to vector<8x64xf32>
    %172 = arith.addf %169, %171 : vector<8x64xf32>
    %cst_83 = arith.constant 5.000000e-01 : f32
    %173 = vector.broadcast %cst_83 : f32 to vector<8x64xf32>
    %174 = arith.mulf %173, %172 : vector<8x64xf32>
    %cst_84 = arith.constant 4.471500e-02 : f32
    %175 = vector.broadcast %cst_84 : f32 to vector<8x64xf32>
    %176 = arith.mulf %175, %172 : vector<8x64xf32>
    %177 = arith.mulf %176, %172 : vector<8x64xf32>
    %178 = arith.mulf %177, %172 : vector<8x64xf32>
    %179 = arith.addf %172, %178 : vector<8x64xf32>
    %cst_85 = arith.constant 0.797884583 : f32
    %180 = vector.broadcast %cst_85 : f32 to vector<8x64xf32>
    %181 = arith.mulf %180, %179 : vector<8x64xf32>
    %182 = math.tanh %181 : vector<8x64xf32>
    %cst_86 = arith.constant 1.000000e+00 : f32
    %183 = vector.broadcast %cst_86 : f32 to vector<8x64xf32>
    %184 = arith.addf %183, %182 : vector<8x64xf32>
    %185 = arith.mulf %174, %184 : vector<8x64xf32>
    %c0_87 = arith.constant 0 : index
    %c0_88 = arith.constant 0 : index
    %186 = vector.load %arg15[%c0_87, %c0_88] : memref<64x32xf32, #tpu.memory_space<vmem>>, vector<64x32xf32>
    %cst_89 = arith.constant dense<0.000000e+00> : vector<8x32xf32>
    %187 = tpu.matmul %185, %186, %cst_89 {dimension_numbers = #tpu.dot_dimension_numbers<[1], [0], [0], [1], [0, 0, 1, 1], [], []>} : vector<8x64xf32>, vector<64x32xf32>, vector<8x32xf32> -> vector<8x32xf32>
    %c0_90 = arith.constant 0 : index
    %c0_91 = arith.constant 0 : index
    %188 = vector.load %arg16[%c0_90, %c0_91] : memref<1x32xf32, #tpu.memory_space<vmem>>, vector<1x32xf32>
    %189 = vector.broadcast %188 : vector<1x32xf32> to vector<8x32xf32>
    %190 = arith.addf %187, %189 : vector<8x32xf32>
    %191 = arith.addf %167, %190 : vector<8x32xf32>
    %c0_92 = arith.constant 0 : index
    %c0_93 = arith.constant 0 : index
    %192 = vector.load %arg17[%c0_92, %c0_93] : memref<1x32xf32, #tpu.memory_space<vmem>>, vector<1x32xf32>
    %c0_94 = arith.constant 0 : index
    %c0_95 = arith.constant 0 : index
    %193 = vector.load %arg18[%c0_94, %c0_95] : memref<1x32xf32, #tpu.memory_space<vmem>>, vector<1x32xf32>
    %cst_96 = arith.constant dense<0.000000e+00> : vector<8xf32>
    %194 = vector.multi_reduction <add>, %191, %cst_96 [1] : vector<8x32xf32> to vector<8xf32>
    %195 = vector.shape_cast %194 : vector<8xf32> to vector<8x1xf32>
    %cst_97 = arith.constant 3.200000e+01 : f32
    %196 = vector.broadcast %cst_97 : f32 to vector<8x1xf32>
    %197 = arith.divf %195, %196 : vector<8x1xf32>
    %198 = vector.broadcast %197 : vector<8x1xf32> to vector<8x32xf32>
    %199 = arith.subf %191, %198 : vector<8x32xf32>
    %200 = arith.mulf %199, %199 : vector<8x32xf32>
    %cst_98 = arith.constant dense<0.000000e+00> : vector<8xf32>
    %201 = vector.multi_reduction <add>, %200, %cst_98 [1] : vector<8x32xf32> to vector<8xf32>
    %202 = vector.shape_cast %201 : vector<8xf32> to vector<8x1xf32>
    %cst_99 = arith.constant 3.200000e+01 : f32
    %203 = vector.broadcast %cst_99 : f32 to vector<8x1xf32>
    %204 = arith.divf %202, %203 : vector<8x1xf32>
    %205 = vector.broadcast %197 : vector<8x1xf32> to vector<8x32xf32>
    %206 = arith.subf %191, %205 : vector<8x32xf32>
    %cst_100 = arith.constant 9.99999974E-6 : f32
    %207 = vector.broadcast %cst_100 : f32 to vector<8x1xf32>
    %208 = arith.addf %204, %207 : vector<8x1xf32>
    %209 = math.rsqrt %208 : vector<8x1xf32>
    %210 = vector.broadcast %209 : vector<8x1xf32> to vector<8x32xf32>
    %211 = arith.mulf %206, %210 : vector<8x32xf32>
    %212 = vector.broadcast %192 : vector<1x32xf32> to vector<8x32xf32>
    %213 = arith.mulf %211, %212 : vector<8x32xf32>
    %214 = vector.broadcast %193 : vector<1x32xf32> to vector<8x32xf32>
    %215 = arith.addf %213, %214 : vector<8x32xf32>
    %c0_101 = arith.constant 0 : index
    %c0_102 = arith.constant 0 : index
    %c0_103 = arith.constant 0 : index
    %216 = vector.load %arg19[%c0_101, %c0_102, %c0_103] : memref<1x8x32xf32, #tpu.memory_space<vmem>>, vector<1x8x32xf32>
    %217 = vector.shape_cast %216 : vector<1x8x32xf32> to vector<8x32xf32>
    %218 = vector.shape_cast %215 : vector<8x32xf32> to vector<1x8x32xf32>
    tpu.vector_store %arg19[%c0_101, %c0_102, %c0_103], %218 {strides = array<i32>} : memref<1x8x32xf32, #tpu.memory_space<vmem>>, vector<1x8x32xf32>,
    return
  }
  func.func @transform_0(%arg0: i32) -> (i32, i32, i32) {
    %c0_i32 = arith.constant 0 : i32
    %c0_i32_0 = arith.constant 0 : i32
    %c0_i32_1 = arith.constant 0 : i32
    return %arg0, %c0_i32, %c0_i32_0 : i32, i32, i32
  }
  func.func @transform_1(%arg0: i32) -> (i32, i32, i32) {
    %c0_i32 = arith.constant 0 : i32
    %c0_i32_0 = arith.constant 0 : i32
    %c0_i32_1 = arith.constant 0 : i32
    return %arg0, %c0_i32, %c0_i32_0 : i32, i32, i32
  }
  func.func @transform_2(%arg0: i32) -> (i32, i32, i32) {
    %c0_i32 = arith.constant 0 : i32
    %c0_i32_0 = arith.constant 0 : i32
    %c0_i32_1 = arith.constant 0 : i32
    return %arg0, %c0_i32, %c0_i32_0 : i32, i32, i32
  }
  func.func @transform_3(%arg0: i32) -> (i32, i32) {
    %c0_i32 = arith.constant 0 : i32
    %c0_i32_0 = arith.constant 0 : i32
    %c0_i32_1 = arith.constant 0 : i32
    return %c0_i32, %c0_i32_0 : i32, i32
  }
  func.func @transform_4(%arg0: i32) -> (i32, i32) {
    %c0_i32 = arith.constant 0 : i32
    %c0_i32_0 = arith.constant 0 : i32
    %c0_i32_1 = arith.constant 0 : i32
    return %c0_i32, %c0_i32_0 : i32, i32
  }
  func.func @transform_5(%arg0: i32) -> (i32, i32) {
    %c0_i32 = arith.constant 0 : i32
    %c0_i32_0 = arith.constant 0 : i32
    %c0_i32_1 = arith.constant 0 : i32
    return %c0_i32, %c0_i32_0 : i32, i32
  }
  func.func @transform_6(%arg0: i32) -> (i32, i32) {
    %c0_i32 = arith.constant 0 : i32
    %c0_i32_0 = arith.constant 0 : i32
    %c0_i32_1 = arith.constant 0 : i32
    return %c0_i32, %c0_i32_0 : i32, i32
  }
  func.func @transform_7(%arg0: i32) -> (i32, i32) {
    %c0_i32 = arith.constant 0 : i32
    %c0_i32_0 = arith.constant 0 : i32
    %c0_i32_1 = arith.constant 0 : i32
    return %c0_i32, %c0_i32_0 : i32, i32
  }
  func.func @transform_8(%arg0: i32) -> (i32, i32) {
    %c0_i32 = arith.constant 0 : i32
    %c0_i32_0 = arith.constant 0 : i32
    %c0_i32_1 = arith.constant 0 : i32
    return %c0_i32, %c0_i32_0 : i32, i32
  }
  func.func @transform_9(%arg0: i32) -> (i32, i32) {
    %c0_i32 = arith.constant 0 : i32
    %c0_i32_0 = arith.constant 0 : i32
    %c0_i32_1 = arith.constant 0 : i32
    return %c0_i32, %c0_i32_0 : i32, i32
  }
  func.func @transform_10(%arg0: i32) -> (i32, i32) {
    %c0_i32 = arith.constant 0 : i32
    %c0_i32_0 = arith.constant 0 : i32
    %c0_i32_1 = arith.constant 0 : i32
    return %c0_i32, %c0_i32_0 : i32, i32
  }
  func.func @transform_11(%arg0: i32) -> (i32, i32) {
    %c0_i32 = arith.constant 0 : i32
    %c0_i32_0 = arith.constant 0 : i32
    %c0_i32_1 = arith.constant 0 : i32
    return %c0_i32, %c0_i32_0 : i32, i32
  }
  func.func @transform_12(%arg0: i32) -> (i32, i32) {
    %c0_i32 = arith.constant 0 : i32
    %c0_i32_0 = arith.constant 0 : i32
    %c0_i32_1 = arith.constant 0 : i32
    return %c0_i32, %c0_i32_0 : i32, i32
  }
  func.func @transform_13(%arg0: i32) -> (i32, i32) {
    %c0_i32 = arith.constant 0 : i32
    %c0_i32_0 = arith.constant 0 : i32
    %c0_i32_1 = arith.constant 0 : i32
    return %c0_i32, %c0_i32_0 : i32, i32
  }
  func.func @transform_14(%arg0: i32) -> (i32, i32) {
    %c0_i32 = arith.constant 0 : i32
    %c0_i32_0 = arith.constant 0 : i32
    %c0_i32_1 = arith.constant 0 : i32
    return %c0_i32, %c0_i32_0 : i32, i32
  }
  func.func @transform_15(%arg0: i32) -> (i32, i32) {
    %c0_i32 = arith.constant 0 : i32
    %c0_i32_0 = arith.constant 0 : i32
    %c0_i32_1 = arith.constant 0 : i32
    return %c0_i32, %c0_i32_0 : i32, i32
  }
  func.func @transform_16(%arg0: i32) -> (i32, i32) {
    %c0_i32 = arith.constant 0 : i32
    %c0_i32_0 = arith.constant 0 : i32
    %c0_i32_1 = arith.constant 0 : i32
    return %c0_i32, %c0_i32_0 : i32, i32
  }
  func.func @transform_17(%arg0: i32) -> (i32, i32) {
    %c0_i32 = arith.constant 0 : i32
    %c0_i32_0 = arith.constant 0 : i32
    %c0_i32_1 = arith.constant 0 : i32
    return %c0_i32, %c0_i32_0 : i32, i32
  }
  func.func @transform_18(%arg0: i32) -> (i32, i32, i32) {
    %c0_i32 = arith.constant 0 : i32
    %c0_i32_0 = arith.constant 0 : i32
    %c0_i32_1 = arith.constant 0 : i32
    return %arg0, %c0_i32, %c0_i32_0 : i32, i32, i32
  }
  func.func @transform_19(%arg0: i32) -> (i32, i32, i32, i32) {
    %c0_i32 = arith.constant 0 : i32
    %c0_i32_0 = arith.constant 0 : i32
    %c0_i32_1 = arith.constant 0 : i32
    %c0_i32_2 = arith.constant 0 : i32
    return %arg0, %c0_i32, %c0_i32_0, %c0_i32_1 : i32, i32, i32, i32
  }
}

</mosaic_0001>

<llo_original>
// kernel: tpu_custom_call.1
$region0: #{tpu_custom_call.1}
  #allocation0 [shape = 'u32[]', space=smem, size = 0x4, offset = 0x4, fixed_abs, tag = 'smem constant byte address 0x4 - core index']
  #allocation1 [shape = 'u32[144,128]{1,0:T(1,128)}', space=vmem, size = 0x12000, scoped, tag = 'internal scratch']
  #allocation2 [shape = 'f32[8,32]{1,0:T(8,128)}', space=vmem, size = 0x1000, scoped, tag = 'scratch operand']
  %s0 = inlined_call_operand.hbm [shape: f32[2,8,32], index: 0, kind: input, shape index: {}]
  %s1 = inlined_call_operand.hbm [shape: f32[2,8,32], index: 1, kind: input, shape index: {}]
  %s2 = inlined_call_operand.hbm [shape: f32[2,8,32], index: 2, kind: input, shape index: {}]
  %s3 = inlined_call_operand.vmem [shape: f32[32,32], index: 3, kind: input, shape index: {}]
  %s4 = inlined_call_operand.vmem [shape: f32[1,32], index: 4, kind: input, shape index: {}]
  %s5 = inlined_call_operand.vmem [shape: f32[32,32], index: 5, kind: input, shape index: {}]
  %s6 = inlined_call_operand.vmem [shape: f32[1,32], index: 6, kind: input, shape index: {}]
  %s7 = inlined_call_operand.vmem [shape: f32[32,32], index: 7, kind: input, shape index: {}]
  %s8 = inlined_call_operand.vmem [shape: f32[1,32], index: 8, kind: input, shape index: {}]
  %s9 = inlined_call_operand.vmem [shape: f32[1,2], index: 9, kind: input, shape index: {}]
  %s10 = inlined_call_operand.vmem [shape: f32[1,32], index: 10, kind: input, shape index: {}]
  %s11 = inlined_call_operand.vmem [shape: f32[1,32], index: 11, kind: input, shape index: {}]
  %s12 = inlined_call_operand.hbm [shape: f32[32,64], index: 12, kind: input, shape index: {}]
  %s13 = inlined_call_operand.vmem [shape: f32[1,64], index: 13, kind: input, shape index: {}]
  %s14 = inlined_call_operand.vmem [shape: f32[64,32], index: 14, kind: input, shape index: {}]
  %s15 = inlined_call_operand.vmem [shape: f32[1,32], index: 15, kind: input, shape index: {}]
  %s16 = inlined_call_operand.vmem [shape: f32[1,32], index: 16, kind: input, shape index: {}]
  %s17 = inlined_call_operand.vmem [shape: f32[1,32], index: 17, kind: input, shape index: {}]
  %s18 = inlined_call_operand.hbm [shape: f32[2,8,32], index: 18, kind: output, shape index: {0}]
  %s19 = inlined_call_operand.hbm [shape: f32[2,2,8,8], index: 19, kind: output, shape index: {1}]
  %20 = xla_tuple %s18, %s19
  %s21 = sld [smem:[#allocation0]]
  $region133: #{tpu_custom_call.1} parent=0
    _
  %s23 = ssub.s32 1, %s21
  %s24 = scalar_select 0, %s23, %s21
  $region1: #{tpu_custom_call.1} parent=0
    #allocation3 [shape = 'u8[8192]{0}', space=vmem, size = 0x2000, scoped, tag = 'input window, operand 0']
    #allocation4 [shape = 's32[2]{0}', space=sflag, size = 0x8, scoped, tag = 'scoped memory for tpu_custom_call.1']
    #allocation5 [shape = 's32[2]{0}', space=sflag, size = 0x8, scoped, tag = 'scoped memory for tpu_custom_call.1']
    #allocation6 [shape = 's32[2]{0}', space=sflag, size = 0x8, scoped, tag = 'scoped memory for tpu_custom_call.1']
    #allocation7 [shape = 'u8[8192]{0}', space=vmem, size = 0x2000, scoped, tag = 'input window, operand 1']
    #allocation8 [shape = 's32[2]{0}', space=sflag, size = 0x8, scoped, tag = 'scoped memory for tpu_custom_call.1']
    #allocation9 [shape = 'u8[8192]{0}', space=vmem, size = 0x2000, scoped, tag = 'input window, operand 2']
    #allocation10 [shape = 'u8[512]{0}', space=smem, size = 0x200, scoped, tag = 'input window, operand 9, single buffered']
    #allocation11 [shape = 'u8[16384]{0}', space=vmem, size = 0x4000, scoped, tag = 'input window, operand 12, single buffered']
    #allocation12 [shape = 's32[1]{0}', space=sflag, size = 0x4, scoped, tag = 'scoped memory for tpu_custom_call.1']
    #allocation13 [shape = 'u8[8192]{0}', space=vmem, size = 0x2000, scoped, tag = 'output window, operand 0']
    #allocation14 [shape = 'u8[16384]{0}', space=vmem, size = 0x4000, scoped, tag = 'output window, operand 1']
    #allocation15 [shape = 's32[2]{0}', space=sflag, size = 0x8, scoped, tag = 'scoped memory for tpu_custom_call.1']
    %25 = vsyncpa [#allocation4], 0
    %s26 = scalar_lea.sflag [#allocation4], 1
    %27 = vsyncpa %s26, 0
    %28 = vsyncpa [#allocation8], 0
    %s29 = scalar_lea.sflag [#allocation8], 1
    %30 = vsyncpa %s29, 0
    %31 = vsyncpa [#allocation6], 0
    %32 = vsyncpa [#allocation12], 0
    %33 = vsyncpa [#allocation5], 0
    %s34 = scalar_lea.sflag [#allocation5], 1
    %35 = vsyncpa %s34, 0
    %36 = vsyncpa [#allocation15], 0
    %s37 = scalar_lea.sflag [#allocation15], 1
    %38 = vsyncpa %s37, 0
    loop: start=0, step=1, limit=4
    $region2: #{tpu_custom_call.1} parent=1 // loop_pre_header
      _
    $region3: #{tpu_custom_call.1} parent=1 // loop_header
      %s40 = sphi 0, %s44
      %p41 = scmp.ge.s32.totalorder %s40, 4
      %s50 = sphi 0, %s52
      %s53 = sphi 0, %s50
      %s54 = sphi 0, %s53
      %s70 = sphi 0, %s54
      %s76 = sphi 0, %s78
      %s79 = sphi 0, %s76
      %s80 = sphi 0, %s79
      %s96 = sphi 0, %s80
      %s102 = sphi 0, %s104
      %s105 = sphi 0, %s102
      %s106 = sphi 0, %s105
      %s122 = sphi 0, %s106
      %s126 = sphi 0, %s126
      %s128 = sphi 0, %s126
      %s129 = sphi 0, %s128
      %s143 = sphi 0, %s129
      %s147 = sphi 0, %s147
      %s149 = sphi 0, %s147
      %s150 = sphi 0, %s149
      %s164 = sphi 0, %s150
      %s168 = sphi 0, %s168
      %s170 = sphi 0, %s168
      %s171 = sphi 0, %s170
      %s185 = sphi 0, %s171
      %s189 = sphi 0, %s189
      %s191 = sphi 0, %s189
      %s192 = sphi 0, %s191
      %s206 = sphi 0, %s192
      %s210 = sphi 0, %s210
      %s212 = sphi 0, %s210
      %s213 = sphi 0, %s212
      %s227 = sphi 0, %s213
      %s231 = sphi 0, %s231
      %s233 = sphi 0, %s231
      %s234 = sphi 0, %s233
      %s248 = sphi 0, %s234
      %s252 = sphi 0, %s252
      %s254 = sphi 0, %s252
      %s255 = sphi 0, %s254
      %s269 = sphi 0, %s255
      %s273 = sphi 0, %s273
      %s275 = sphi 0, %s273
      %s276 = sphi 0, %s275
      %s290 = sphi 0, %s276
      %s294 = sphi 0, %s294
      %s296 = sphi 0, %s294
      %s297 = sphi 0, %s296
      %s311 = sphi 0, %s297
      %s315 = sphi 0, %s315
      %s317 = sphi 0, %s315
      %s318 = sphi 0, %s317
      %s332 = sphi 0, %s318
      %s336 = sphi 0, %s336
      %s338 = sphi 0, %s336
      %s339 = sphi 0, %s338
      %s353 = sphi 0, %s339
      %s357 = sphi 0, %s357
      %s359 = sphi 0, %s357
      %s360 = sphi 0, %s359
      %s374 = sphi 0, %s360
      %s378 = sphi 0, %s378
      %s380 = sphi 0, %s378
      %s381 = sphi 0, %s380
      %s395 = sphi 0, %s381
      %s399 = sphi 0, %s399
      %s401 = sphi 0, %s399
      %s402 = sphi 0, %s401
      %s416 = sphi 0, %s402
      %s420 = sphi 0, %s420
      %s422 = sphi 0, %s420
      %s423 = sphi 0, %s422
      %s437 = sphi 0, %s423
      %s443 = sphi 0, %s445
      %s446 = sphi 0, %s443
      %s447 = sphi 0, %s446
      %s463 = sphi 0, %s447
      %s469 = sphi 0, %s471
      %s472 = sphi 0, %s469
      %s473 = sphi 0, %s472
      %s489 = sphi 0, %s473
    $region4: #{tpu_custom_call.1} parent=1 // loop_header_branch
      %43 = sbr.rel (%p41) target = $region8
    $region5: #{tpu_custom_call.1} parent=1 // loop_body
      %s45 = ssub.s32 %s40, 1
      %s46 = ssub.s32 %s40, 2
      %s47 = sadd.s32 %s40, 1
      %s48 = ssub.s32 %s40, %s47
      %p49 = scmp.eq.s32.totalorder %s48, 0
      %s51 = sadd.s32 %s50, 1
      %s52 = scalar_select %p49, %s50, %s51
      %p55 = pneg %p49
      %p56 = scmp.eq.s32.totalorder %s40, 1
      %p57 = por %p55, %p56
      %p58 = scmp.ne.s32.totalorder %s50, %s53
      %p59 = scmp.eq.s32.totalorder %s40, 0
      %p60 = por %p58, %p59
      %p61 = scmp.ne.s32.totalorder %s50, %s53
      %p62 = scmp.eq.s32.totalorder %s45, 1
      %p63 = por %p61, %p62
      %p64 = scmp.ne.s32.totalorder %s53, %s54
      %p65 = scmp.eq.s32.totalorder %s45, 0
      %p66 = por %p64, %p65
      %p67 = scmp.ne.s32.totalorder %s53, %s54
      %p68 = scmp.eq.s32.totalorder %s46, 1
      %p69 = por %p67, %p68
      %p71 = scmp.ne.s32.totalorder %s54, %s70
      %p72 = scmp.eq.s32.totalorder %s46, 0
      %p73 = por %p71, %p72
      %s74 = ssub.s32 %s40, %s47
      %p75 = scmp.eq.s32.totalorder %s74, 0
      %s77 = sadd.s32 %s76, 1
      %s78 = scalar_select %p75, %s76, %s77
      %p81 = pneg %p75
      %p82 = scmp.eq.s32.totalorder %s40, 1
      %p83 = por %p81, %p82
      %p84 = scmp.ne.s32.totalorder %s76, %s79
      %p85 = scmp.eq.s32.totalorder %s40, 0
      %p86 = por %p84, %p85
      %p87 = scmp.ne.s32.totalorder %s76, %s79
      %p88 = scmp.eq.s32.totalorder %s45, 1
      %p89 = por %p87, %p88
      %p90 = scmp.ne.s32.totalorder %s79, %s80
      %p91 = scmp.eq.s32.totalorder %s45, 0
      %p92 = por %p90, %p91
      %p93 = scmp.ne.s32.totalorder %s79, %s80
      %p94 = scmp.eq.s32.totalorder %s46, 1
      %p95 = por %p93, %p94
      %p97 = scmp.ne.s32.totalorder %s80, %s96
      %p98 = scmp.eq.s32.totalorder %s46, 0
      %p99 = por %p97, %p98
      %s100 = ssub.s32 %s40, %s47
      %p101 = scmp.eq.s32.totalorder %s100, 0
      %s103 = sadd.s32 %s102, 1
      %s104 = scalar_select %p101, %s102, %s103
      %p107 = pneg %p101
      %p108 = scmp.eq.s32.totalorder %s40, 1
      %p109 = por %p107, %p108
      %p110 = scmp.ne.s32.totalorder %s102, %s105
      %p111 = scmp.eq.s32.totalorder %s40, 0
      %p112 = por %p110, %p111
      %p113 = scmp.ne.s32.totalorder %s102, %s105
      %p114 = scmp.eq.s32.totalorder %s45, 1
      %p115 = por %p113, %p114
      %p116 = scmp.ne.s32.totalorder %s105, %s106
      %p117 = scmp.eq.s32.totalorder %s45, 0
      %p118 = por %p116, %p117
      %p119 = scmp.ne.s32.totalorder %s105, %s106
      %p120 = scmp.eq.s32.totalorder %s46, 1
      %p121 = por %p119, %p120
      %p123 = scmp.ne.s32.totalorder %s106, %s122
      %p124 = scmp.eq.s32.totalorder %s46, 0
      %p125 = por %p123, %p124
      %s127 = sadd.s32 %s126, 1
      %p130 = scmp.eq.s32.totalorder %s40, 1
      %p131 = scmp.ne.s32.totalorder %s126, %s128
      %p132 = scmp.eq.s32.totalorder %s40, 0
      %p133 = por %p131, %p132
      %p134 = scmp.ne.s32.totalorder %s126, %s128
      %p135 = scmp.eq.s32.totalorder %s45, 1
      %p136 = por %p134, %p135
      %p137 = scmp.ne.s32.totalorder %s128, %s129
      %p138 = scmp.eq.s32.totalorder %s45, 0
      %p139 = por %p137, %p138
      %p140 = scmp.ne.s32.totalorder %s128, %s129
      %p141 = scmp.eq.s32.totalorder %s46, 1
      %p142 = por %p140, %p141
      %p144 = scmp.ne.s32.totalorder %s129, %s143
      %p145 = scmp.eq.s32.totalorder %s46, 0
      %p146 = por %p144, %p145
      %s148 = sadd.s32 %s147, 1
      %p151 = scmp.eq.s32.totalorder %s40, 1
      %p152 = scmp.ne.s32.totalorder %s147, %s149
      %p153 = scmp.eq.s32.totalorder %s40, 0
      %p154 = por %p152, %p153
      %p155 = scmp.ne.s32.totalorder %s147, %s149
      %p156 = scmp.eq.s32.totalorder %s45, 1
      %p157 = por %p155, %p156
      %p158 = scmp.ne.s32.totalorder %s149, %s150
      %p159 = scmp.eq.s32.totalorder %s45, 0
      %p160 = por %p158, %p159
      %p161 = scmp.ne.s32.totalorder %s149, %s150
      %p162 = scmp.eq.s32.totalorder %s46, 1
      %p163 = por %p161, %p162
      %p165 = scmp.ne.s32.totalorder %s150, %s164
      %p166 = scmp.eq.s32.totalorder %s46, 0
      %p167 = por %p165, %p166
      %s169 = sadd.s32 %s168, 1
      %p172 = scmp.eq.s32.totalorder %s40, 1
      %p173 = scmp.ne.s32.totalorder %s168, %s170
      %p174 = scmp.eq.s32.totalorder %s40, 0
      %p175 = por %p173, %p174
      %p176 = scmp.ne.s32.totalorder %s168, %s170
      %p177 = scmp.eq.s32.totalorder %s45, 1
      %p178 = por %p176, %p177
      %p179 = scmp.ne.s32.totalorder %s170, %s171
      %p180 = scmp.eq.s32.totalorder %s45, 0
      %p181 = por %p179, %p180
      %p182 = scmp.ne.s32.totalorder %s170, %s171
      %p183 = scmp.eq.s32.totalorder %s46, 1
      %p184 = por %p182, %p183
      %p186 = scmp.ne.s32.totalorder %s171, %s185
      %p187 = scmp.eq.s32.totalorder %s46, 0
      %p188 = por %p186, %p187
      %s190 = sadd.s32 %s189, 1
      %p193 = scmp.eq.s32.totalorder %s40, 1
      %p194 = scmp.ne.s32.totalorder %s189, %s191
      %p195 = scmp.eq.s32.totalorder %s40, 0
      %p196 = por %p194, %p195
      %p197 = scmp.ne.s32.totalorder %s189, %s191
      %p198 = scmp.eq.s32.totalorder %s45, 1
      %p199 = por %p197, %p198
      %p200 = scmp.ne.s32.totalorder %s191, %s192
      %p201 = scmp.eq.s32.totalorder %s45, 0
      %p202 = por %p200, %p201
      %p203 = scmp.ne.s32.totalorder %s191, %s192
      %p204 = scmp.eq.s32.totalorder %s46, 1
      %p205 = por %p203, %p204
      %p207 = scmp.ne.s32.totalorder %s192, %s206
      %p208 = scmp.eq.s32.totalorder %s46, 0
      %p209 = por %p207, %p208
      %s211 = sadd.s32 %s210, 1
      %p214 = scmp.eq.s32.totalorder %s40, 1
      %p215 = scmp.ne.s32.totalorder %s210, %s212
      %p216 = scmp.eq.s32.totalorder %s40, 0
      %p217 = por %p215, %p216
      %p218 = scmp.ne.s32.totalorder %s210, %s212
      %p219 = scmp.eq.s32.totalorder %s45, 1
      %p220 = por %p218, %p219
      %p221 = scmp.ne.s32.totalorder %s212, %s213
      %p222 = scmp.eq.s32.totalorder %s45, 0
      %p223 = por %p221, %p222
      %p224 = scmp.ne.s32.totalorder %s212, %s213
      %p225 = scmp.eq.s32.totalorder %s46, 1
      %p226 = por %p224, %p225
      %p228 = scmp.ne.s32.totalorder %s213, %s227
      %p229 = scmp.eq.s32.totalorder %s46, 0
      %p230 = por %p228, %p229
      %s232 = sadd.s32 %s231, 1
      %p235 = scmp.eq.s32.totalorder %s40, 1
      %p236 = scmp.ne.s32.totalorder %s231, %s233
      %p237 = scmp.eq.s32.totalorder %s40, 0
      %p238 = por %p236, %p237
      %p239 = scmp.ne.s32.totalorder %s231, %s233
      %p240 = scmp.eq.s32.totalorder %s45, 1
      %p241 = por %p239, %p240
      %p242 = scmp.ne.s32.totalorder %s233, %s234
      %p243 = scmp.eq.s32.totalorder %s45, 0
      %p244 = por %p242, %p243
      %p245 = scmp.ne.s32.totalorder %s233, %s234
      %p246 = scmp.eq.s32.totalorder %s46, 1
      %p247 = por %p245, %p246
      %p249 = scmp.ne.s32.totalorder %s234, %s248
      %p250 = scmp.eq.s32.totalorder %s46, 0
      %p251 = por %p249, %p250
      %s253 = sadd.s32 %s252, 1
      %p256 = scmp.eq.s32.totalorder %s40, 1
      %p257 = scmp.ne.s32.totalorder %s252, %s254
      %p258 = scmp.eq.s32.totalorder %s40, 0
      %p259 = por %p257, %p258
      %p260 = scmp.ne.s32.totalorder %s252, %s254
      %p261 = scmp.eq.s32.totalorder %s45, 1
      %p262 = por %p260, %p261
      %p263 = scmp.ne.s32.totalorder %s254, %s255
      %p264 = scmp.eq.s32.totalorder %s45, 0
      %p265 = por %p263, %p264
      %p266 = scmp.ne.s32.totalorder %s254, %s255
      %p267 = scmp.eq.s32.totalorder %s46, 1
      %p268 = por %p266, %p267
      %p270 = scmp.ne.s32.totalorder %s255, %s269
      %p271 = scmp.eq.s32.totalorder %s46, 0
      %p272 = por %p270, %p271
      %s274 = sadd.s32 %s273, 1
      %p277 = scmp.eq.s32.totalorder %s40, 1
      %p278 = scmp.ne.s32.totalorder %s273, %s275
      %p279 = scmp.eq.s32.totalorder %s40, 0
      %p280 = por %p278, %p279
      %p281 = scmp.ne.s32.totalorder %s273, %s275
      %p282 = scmp.eq.s32.totalorder %s45, 1
      %p283 = por %p281, %p282
      %p284 = scmp.ne.s32.totalorder %s275, %s276
      %p285 = scmp.eq.s32.totalorder %s45, 0
      %p286 = por %p284, %p285
      %p287 = scmp.ne.s32.totalorder %s275, %s276
      %p288 = scmp.eq.s32.totalorder %s46, 1
      %p289 = por %p287, %p288
      %p291 = scmp.ne.s32.totalorder %s276, %s290
      %p292 = scmp.eq.s32.totalorder %s46, 0
      %p293 = por %p291, %p292
      %s295 = sadd.s32 %s294, 1
      %p298 = scmp.eq.s32.totalorder %s40, 1
      %p299 = scmp.ne.s32.totalorder %s294, %s296
      %p300 = scmp.eq.s32.totalorder %s40, 0
      %p301 = por %p299, %p300
      %p302 = scmp.ne.s32.totalorder %s294, %s296
      %p303 = scmp.eq.s32.totalorder %s45, 1
      %p304 = por %p302, %p303
      %p305 = scmp.ne.s32.totalorder %s296, %s297
      %p306 = scmp.eq.s32.totalorder %s45, 0
      %p307 = por %p305, %p306
      %p308 = scmp.ne.s32.totalorder %s296, %s297
      %p309 = scmp.eq.s32.totalorder %s46, 1
      %p310 = por %p308, %p309
      %p312 = scmp.ne.s32.totalorder %s297, %s311
      %p313 = scmp.eq.s32.totalorder %s46, 0
      %p314 = por %p312, %p313
      %s316 = sadd.s32 %s315, 1
      %p319 = scmp.eq.s32.totalorder %s40, 1
      %p320 = scmp.ne.s32.totalorder %s315, %s317
      %p321 = scmp.eq.s32.totalorder %s40, 0
      %p322 = por %p320, %p321
      %p323 = scmp.ne.s32.totalorder %s315, %s317
      %p324 = scmp.eq.s32.totalorder %s45, 1
      %p325 = por %p323, %p324
      %p326 = scmp.ne.s32.totalorder %s317, %s318
      %p327 = scmp.eq.s32.totalorder %s45, 0
      %p328 = por %p326, %p327
      %p329 = scmp.ne.s32.totalorder %s317, %s318
      %p330 = scmp.eq.s32.totalorder %s46, 1
      %p331 = por %p329, %p330
      %p333 = scmp.ne.s32.totalorder %s318, %s332
      %p334 = scmp.eq.s32.totalorder %s46, 0
      %p335 = por %p333, %p334
      %s337 = sadd.s32 %s336, 1
      %p340 = scmp.eq.s32.totalorder %s40, 1
      %p341 = scmp.ne.s32.totalorder %s336, %s338
      %p342 = scmp.eq.s32.totalorder %s40, 0
      %p343 = por %p341, %p342
      %p344 = scmp.ne.s32.totalorder %s336, %s338
      %p345 = scmp.eq.s32.totalorder %s45, 1
      %p346 = por %p344, %p345
      %p347 = scmp.ne.s32.totalorder %s338, %s339
      %p348 = scmp.eq.s32.totalorder %s45, 0
      %p349 = por %p347, %p348
      %p350 = scmp.ne.s32.totalorder %s338, %s339
      %p351 = scmp.eq.s32.totalorder %s46, 1
      %p352 = por %p350, %p351
      %p354 = scmp.ne.s32.totalorder %s339, %s353
      %p355 = scmp.eq.s32.totalorder %s46, 0
      %p356 = por %p354, %p355
      %s358 = sadd.s32 %s357, 1
      %p361 = scmp.eq.s32.totalorder %s40, 1
      %p362 = scmp.ne.s32.totalorder %s357, %s359
      %p363 = scmp.eq.s32.totalorder %s40, 0
      %p364 = por %p362, %p363
      %p365 = scmp.ne.s32.totalorder %s357, %s359
      %p366 = scmp.eq.s32.totalorder %s45, 1
      %p367 = por %p365, %p366
      %p368 = scmp.ne.s32.totalorder %s359, %s360
      %p369 = scmp.eq.s32.totalorder %s45, 0
      %p370 = por %p368, %p369
      %p371 = scmp.ne.s32.totalorder %s359, %s360
      %p372 = scmp.eq.s32.totalorder %s46, 1
      %p373 = por %p371, %p372
      %p375 = scmp.ne.s32.totalorder %s360, %s374
      %p376 = scmp.eq.s32.totalorder %s46, 0
      %p377 = por %p375, %p376
      %s379 = sadd.s32 %s378, 1
      %p382 = scmp.eq.s32.totalorder %s40, 1
      %p383 = scmp.ne.s32.totalorder %s378, %s380
      %p384 = scmp.eq.s32.totalorder %s40, 0
      %p385 = por %p383, %p384
      %p386 = scmp.ne.s32.totalorder %s378, %s380
      %p387 = scmp.eq.s32.totalorder %s45, 1
      %p388 = por %p386, %p387
      %p389 = scmp.ne.s32.totalorder %s380, %s381
      %p390 = scmp.eq.s32.totalorder %s45, 0
      %p391 = por %p389, %p390
      %p392 = scmp.ne.s32.totalorder %s380, %s381
      %p393 = scmp.eq.s32.totalorder %s46, 1
      %p394 = por %p392, %p393
      %p396 = scmp.ne.s32.totalorder %s381, %s395
      %p397 = scmp.eq.s32.totalorder %s46, 0
      %p398 = por %p396, %p397
      %s400 = sadd.s32 %s399, 1
      %p403 = scmp.eq.s32.totalorder %s40, 1
      %p404 = scmp.ne.s32.totalorder %s399, %s401
      %p405 = scmp.eq.s32.totalorder %s40, 0
      %p406 = por %p404, %p405
      %p407 = scmp.ne.s32.totalorder %s399, %s401
      %p408 = scmp.eq.s32.totalorder %s45, 1
      %p409 = por %p407, %p408
      %p410 = scmp.ne.s32.totalorder %s401, %s402
      %p411 = scmp.eq.s32.totalorder %s45, 0
      %p412 = por %p410, %p411
      %p413 = scmp.ne.s32.totalorder %s401, %s402
      %p414 = scmp.eq.s32.totalorder %s46, 1
      %p415 = por %p413, %p414
      %p417 = scmp.ne.s32.totalorder %s402, %s416
      %p418 = scmp.eq.s32.totalorder %s46, 0
      %p419 = por %p417, %p418
      %s421 = sadd.s32 %s420, 1
      %p424 = scmp.eq.s32.totalorder %s40, 1
      %p425 = scmp.ne.s32.totalorder %s420, %s422
      %p426 = scmp.eq.s32.totalorder %s40, 0
      %p427 = por %p425, %p426
      %p428 = scmp.ne.s32.totalorder %s420, %s422
      %p429 = scmp.eq.s32.totalorder %s45, 1
      %p430 = por %p428, %p429
      %p431 = scmp.ne.s32.totalorder %s422, %s423
      %p432 = scmp.eq.s32.totalorder %s45, 0
      %p433 = por %p431, %p432
      %p434 = scmp.ne.s32.totalorder %s422, %s423
      %p435 = scmp.eq.s32.totalorder %s46, 1
      %p436 = por %p434, %p435
      %p438 = scmp.ne.s32.totalorder %s423, %s437
      %p439 = scmp.eq.s32.totalorder %s46, 0
      %p440 = por %p438, %p439
      %s441 = ssub.s32 %s40, %s47
      %p442 = scmp.eq.s32.totalorder %s441, 0
      %s444 = sadd.s32 %s443, 1
      %s445 = scalar_select %p442, %s443, %s444
      %p448 = pneg %p442
      %p449 = scmp.eq.s32.totalorder %s40, 1
      %p450 = por %p448, %p449
      %p451 = scmp.ne.s32.totalorder %s443, %s446
      %p452 = scmp.eq.s32.totalorder %s40, 0
      %p453 = por %p451, %p452
      %p454 = scmp.ne.s32.totalorder %s443, %s446
      %p455 = scmp.eq.s32.totalorder %s45, 1
      %p456 = por %p454, %p455
      %p457 = scmp.ne.s32.totalorder %s446, %s447
      %p458 = scmp.eq.s32.totalorder %s45, 0
      %p459 = por %p457, %p458
      %p460 = scmp.ne.s32.totalorder %s446, %s447
      %p461 = scmp.eq.s32.totalorder %s46, 1
      %p462 = por %p460, %p461
      %p464 = scmp.ne.s32.totalorder %s447, %s463
      %p465 = scmp.eq.s32.totalorder %s46, 0
      %p466 = por %p464, %p465
      %s467 = ssub.s32 %s40, %s47
      %p468 = scmp.eq.s32.totalorder %s467, 0
      %s470 = sadd.s32 %s469, 1
      %s471 = scalar_select %p468, %s469, %s470
      %p474 = pneg %p468
      %p475 = scmp.eq.s32.totalorder %s40, 1
      %p476 = por %p474, %p475
      %p477 = scmp.ne.s32.totalorder %s469, %s472
      %p478 = scmp.eq.s32.totalorder %s40, 0
      %p479 = por %p477, %p478
      %p480 = scmp.ne.s32.totalorder %s469, %s472
      %p481 = scmp.eq.s32.totalorder %s45, 1
      %p482 = por %p480, %p481
      %p483 = scmp.ne.s32.totalorder %s472, %s473
      %p484 = scmp.eq.s32.totalorder %s45, 0
      %p485 = por %p483, %p484
      %p486 = scmp.ne.s32.totalorder %s472, %s473
      %p487 = scmp.eq.s32.totalorder %s46, 1
      %p488 = por %p486, %p487
      %p490 = scmp.ne.s32.totalorder %s473, %s489
      %p491 = scmp.eq.s32.totalorder %s46, 0
      %p492 = por %p490, %p491
      %p493 = scmp.le.s32.totalorder 1, %s40
      %p494 = scmp.lt.s32.totalorder %s40, 3
      %p495 = pnand %p493, %p494
      %p496 = pneg %p495
      // Predicated region
      $region9: #{tpu_custom_call.1} parent=5 // pred_check
        _
      $region10: #{tpu_custom_call.1} parent=5 // pred_check_branch
        %498 = sbr.rel (%p495) target = $region12
      $region11: #{tpu_custom_call.1} parent=5 // pred_region
        %s499 = ssub.s32 %s40, 1
        // Predicated region
        $region13: #{tpu_custom_call.1} parent=11 // pred_check
          %p500 = pneg %p139
        $region14: #{tpu_custom_call.1} parent=11 // pred_check_branch
          %502 = sbr.rel (%p500) target = $region16
        $region15: #{tpu_custom_call.1} parent=11 // pred_region
          _
        $region16: #{tpu_custom_call.1} parent=11 // pred_fallthru
          _
        // Predicated region
        $region17: #{tpu_custom_call.1} parent=11 // pred_check
          %p503 = pneg %p160
        $region18: #{tpu_custom_call.1} parent=11 // pred_check_branch
          %505 = sbr.rel (%p503) target = $region20
        $region19: #{tpu_custom_call.1} parent=11 // pred_region
          _
        $region20: #{tpu_custom_call.1} parent=11 // pred_fallthru
          _
        // Predicated region
        $region21: #{tpu_custom_call.1} parent=11 // pred_check
          %p506 = pneg %p181
        $region22: #{tpu_custom_call.1} parent=11 // pred_check_branch
          %508 = sbr.rel (%p506) target = $region24
        $region23: #{tpu_custom_call.1} parent=11 // pred_region
          _
        $region24: #{tpu_custom_call.1} parent=11 // pred_fallthru
          _
        // Predicated region
        $region25: #{tpu_custom_call.1} parent=11 // pred_check
          %p509 = pneg %p202
        $region26: #{tpu_custom_call.1} parent=11 // pred_check_branch
          %511 = sbr.rel (%p509) target = $region28
        $region27: #{tpu_custom_call.1} parent=11 // pred_region
          _
        $region28: #{tpu_custom_call.1} parent=11 // pred_fallthru
          _
        // Predicated region
        $region29: #{tpu_custom_call.1} parent=11 // pred_check
          %p512 = pneg %p223
        $region30: #{tpu_custom_call.1} parent=11 // pred_check_branch
          %514 = sbr.rel (%p512) target = $region32
        $region31: #{tpu_custom_call.1} parent=11 // pred_region
          _
        $region32: #{tpu_custom_call.1} parent=11 // pred_fallthru
          _
        // Predicated region
        $region33: #{tpu_custom_call.1} parent=11 // pred_check
          %p515 = pneg %p244
        $region34: #{tpu_custom_call.1} parent=11 // pred_check_branch
          %517 = sbr.rel (%p515) target = $region36
        $region35: #{tpu_custom_call.1} parent=11 // pred_region
          _
        $region36: #{tpu_custom_call.1} parent=11 // pred_fallthru
          _
        // Predicated region
        $region37: #{tpu_custom_call.1} parent=11 // pred_check
          %p518 = pneg %p265
        $region38: #{tpu_custom_call.1} parent=11 // pred_check_branch
          %520 = sbr.rel (%p518) target = $region40
        $region39: #{tpu_custom_call.1} parent=11 // pred_region
          %s522 = ssub.s32 16, 16
          %523 = vsyncadd [#allocation6], %s522
          %s525 = sshll.u32 %s9, 4
          %s526 = int_to_ptr.vmem [resolvable:$true] %s525
          %528 = dma.vmem_to_smem %s526, 16, [#allocation10], [#allocation6]
        $region40: #{tpu_custom_call.1} parent=11 // pred_fallthru
          _
        // Predicated region
        $region41: #{tpu_custom_call.1} parent=11 // pred_check
          %p529 = pneg %p286
        $region42: #{tpu_custom_call.1} parent=11 // pred_check_branch
          %531 = sbr.rel (%p529) target = $region44
        $region43: #{tpu_custom_call.1} parent=11 // pred_region
          _
        $region44: #{tpu_custom_call.1} parent=11 // pred_fallthru
          _
        // Predicated region
        $region45: #{tpu_custom_call.1} parent=11 // pred_check
          %p532 = pneg %p307
        $region46: #{tpu_custom_call.1} parent=11 // pred_check_branch
          %534 = sbr.rel (%p532) target = $region48
        $region47: #{tpu_custom_call.1} parent=11 // pred_region
          _
        $region48: #{tpu_custom_call.1} parent=11 // pred_fallthru
          _
        // Predicated region
        $region49: #{tpu_custom_call.1} parent=11 // pred_check
          %p535 = pneg %p328
        $region50: #{tpu_custom_call.1} parent=11 // pred_check_branch
          %537 = sbr.rel (%p535) target = $region52
        $region51: #{tpu_custom_call.1} parent=11 // pred_region
          %s539 = ssub.s32 512, 512
          %540 = vsyncadd [#allocation12], %s539
          %s541 = sshll.u32 [#allocation11], 4
          %s542 = int_to_ptr.vmem [resolvable:$true] %s541
          %547 = dma.hbm_to_vmem [thread:$0]  %s12, 512, %s542, [#allocation12], 128, 128, 8
        $region52: #{tpu_custom_call.1} parent=11 // pred_fallthru
          _
        // Predicated region
        $region53: #{tpu_custom_call.1} parent=11 // pred_check
          %p548 = pneg %p349
        $region54: #{tpu_custom_call.1} parent=11 // pred_check_branch
          %550 = sbr.rel (%p548) target = $region56
        $region55: #{tpu_custom_call.1} parent=11 // pred_region
          _
        $region56: #{tpu_custom_call.1} parent=11 // pred_fallthru
          _
        // Predicated region
        $region57: #{tpu_custom_call.1} parent=11 // pred_check
          %p551 = pneg %p370
        $region58: #{tpu_custom_call.1} parent=11 // pred_check_branch
          %553 = sbr.rel (%p551) target = $region60
        $region59: #{tpu_custom_call.1} parent=11 // pred_region
          _
        $region60: #{tpu_custom_call.1} parent=11 // pred_fallthru
          _
        // Predicated region
        $region61: #{tpu_custom_call.1} parent=11 // pred_check
          %p554 = pneg %p391
        $region62: #{tpu_custom_call.1} parent=11 // pred_check_branch
          %556 = sbr.rel (%p554) target = $region64
        $region63: #{tpu_custom_call.1} parent=11 // pred_region
          _
        $region64: #{tpu_custom_call.1} parent=11 // pred_fallthru
          _
        // Predicated region
        $region65: #{tpu_custom_call.1} parent=11 // pred_check
          %p557 = pneg %p412
        $region66: #{tpu_custom_call.1} parent=11 // pred_check_branch
          %559 = sbr.rel (%p557) target = $region68
        $region67: #{tpu_custom_call.1} parent=11 // pred_region
          _
        $region68: #{tpu_custom_call.1} parent=11 // pred_fallthru
          _
        // Predicated region
        $region69: #{tpu_custom_call.1} parent=11 // pred_check
          %p560 = pneg %p433
        $region70: #{tpu_custom_call.1} parent=11 // pred_check_branch
          %562 = sbr.rel (%p560) target = $region72
        $region71: #{tpu_custom_call.1} parent=11 // pred_region
          _
        $region72: #{tpu_custom_call.1} parent=11 // pred_fallthru
          _
      $region12: #{tpu_custom_call.1} parent=5 // pred_fallthru
        _
      %p563 = scmp.lt.s32.totalorder %s40, 2
      // Predicated region
      $region73: #{tpu_custom_call.1} parent=5 // pred_check
        %p564 = pneg %p563
      $region74: #{tpu_custom_call.1} parent=5 // pred_check_branch
        %566 = sbr.rel (%p564) target = $region76
      $region75: #{tpu_custom_call.1} parent=5 // pred_region
        // Predicated region
        $region77: #{tpu_custom_call.1} parent=75 // pred_check
          %p567 = pneg %p60
        $region78: #{tpu_custom_call.1} parent=75 // pred_check_branch
          %569 = sbr.rel (%p567) target = $region80
        $region79: #{tpu_custom_call.1} parent=75 // pred_region
          %s570 = sand.u32 %s50, 1
          %s571 = scalar_lea.sflag [#allocation4], %s570
          %s572 = sand.u32 %s50, 1
          %s573 = smul.addr %s572, 8
          %s574 = scalar_lea.vmem [#allocation3], %s573
          %s576 = ssub.s32 128, 128
          %577 = vsyncadd %s571, %s576
          %s578 = smul.addr %s40, 128
          %s579 = scalar_lea.hbm %s0, %s578
          %s581 = sshll.u32 %s574, 4
          %s582 = int_to_ptr.vmem [resolvable:$true] %s581
          %584 = dma.hbm_to_vmem [thread:$0]  %s579, 128, %s582, %s571
        $region80: #{tpu_custom_call.1} parent=75 // pred_fallthru
          _
        // Predicated region
        $region81: #{tpu_custom_call.1} parent=75 // pred_check
          %p585 = pneg %p86
        $region82: #{tpu_custom_call.1} parent=75 // pred_check_branch
          %587 = sbr.rel (%p585) target = $region84
        $region83: #{tpu_custom_call.1} parent=75 // pred_region
          %s588 = sand.u32 %s40, 1
          %s589 = scalar_lea.sflag [#allocation8], %s588
          %s590 = sand.u32 %s76, 1
          %s591 = smul.addr %s590, 8
          %s592 = scalar_lea.vmem [#allocation7], %s591
          %s594 = ssub.s32 128, 128
          %595 = vsyncadd %s589, %s594
          %s596 = smul.addr %s40, 128
          %s597 = scalar_lea.hbm %s1, %s596
          %s599 = sshll.u32 %s592, 4
          %s600 = int_to_ptr.vmem [resolvable:$true] %s599
          %602 = dma.hbm_to_vmem [thread:$0]  %s597, 128, %s600, %s589
        $region84: #{tpu_custom_call.1} parent=75 // pred_fallthru
          _
        // Predicated region
        $region85: #{tpu_custom_call.1} parent=75 // pred_check
          %p603 = pneg %p112
        $region86: #{tpu_custom_call.1} parent=75 // pred_check_branch
          %605 = sbr.rel (%p603) target = $region88
        $region87: #{tpu_custom_call.1} parent=75 // pred_region
          %s606 = sand.u32 %s40, 1
          %s607 = scalar_lea.sflag [#allocation8], %s606
          %s608 = sand.u32 %s102, 1
          %s609 = smul.addr %s608, 8
          %s610 = scalar_lea.vmem [#allocation9], %s609
          %s612 = ssub.s32 128, 128
          %613 = vsyncadd %s607, %s612
          %s614 = smul.addr %s40, 128
          %s615 = scalar_lea.hbm %s2, %s614
          %s617 = sshll.u32 %s610, 4
          %s618 = int_to_ptr.vmem [resolvable:$true] %s617
          %620 = dma.hbm_to_vmem [thread:$0]  %s615, 128, %s618, %s607
        $region88: #{tpu_custom_call.1} parent=75 // pred_fallthru
          _
      $region76: #{tpu_custom_call.1} parent=5 // pred_fallthru
        _
      %p621 = scmp.le.s32.totalorder 1, %s40
      %p622 = scmp.lt.s32.totalorder %s40, 3
      %p623 = pnand %p621, %p622
      %p624 = pneg %p623
      // Predicated region
      $region89: #{tpu_custom_call.1} parent=5 // pred_check
        _
      $region90: #{tpu_custom_call.1} parent=5 // pred_check_branch
        %626 = sbr.rel (%p623) target = $region92
      $region91: #{tpu_custom_call.1} parent=5 // pred_region
        %s627 = ssub.s32 %s40, 1
        %s628 = sand.u32 %s53, 1
        %s629 = scalar_lea.sflag [#allocation4], %s628
        %s630 = sand.u32 %s53, 1
        %s631 = smul.addr %s630, 8
        %s632 = scalar_lea.vmem [#allocation3], %s631
        // Predicated region
        $region93: #{tpu_custom_call.1} parent=91 // pred_check
          %p633 = pneg %p66
        $region94: #{tpu_custom_call.1} parent=91 // pred_check_branch
          %635 = sbr.rel (%p633) target = $region96
        $region95: #{tpu_custom_call.1} parent=91 // pred_region
          %636 = dma.done %s629, 128
        $region96: #{tpu_custom_call.1} parent=91 // pred_fallthru
          _
        %s637 = sand.u32 %s45, 1
        %s638 = scalar_lea.sflag [#allocation8], %s637
        %s639 = sand.u32 %s79, 1
        %s640 = smul.addr %s639, 8
        %s641 = scalar_lea.vmem [#allocation7], %s640
        // Predicated region
        $region97: #{tpu_custom_call.1} parent=91 // pred_check
          %p642 = pneg %p92
        $region98: #{tpu_custom_call.1} parent=91 // pred_check_branch
          %644 = sbr.rel (%p642) target = $region100
        $region99: #{tpu_custom_call.1} parent=91 // pred_region
          %645 = dma.done %s638, 128
        $region100: #{tpu_custom_call.1} parent=91 // pred_fallthru
          _
        %s646 = sand.u32 %s45, 1
        %s647 = scalar_lea.sflag [#allocation8], %s646
        %s648 = sand.u32 %s105, 1
        %s649 = smul.addr %s648, 8
        %s650 = scalar_lea.vmem [#allocation9], %s649
        // Predicated region
        $region101: #{tpu_custom_call.1} parent=91 // pred_check
          %p651 = pneg %p118
        $region102: #{tpu_custom_call.1} parent=91 // pred_check_branch
          %653 = sbr.rel (%p651) target = $region104
        $region103: #{tpu_custom_call.1} parent=91 // pred_region
          %654 = dma.done %s647, 128
        $region104: #{tpu_custom_call.1} parent=91 // pred_fallthru
          _
        // Predicated region
        $region105: #{tpu_custom_call.1} parent=91 // pred_check
          %p655 = pneg %p265
        $region106: #{tpu_custom_call.1} parent=91 // pred_check_branch
          %657 = sbr.rel (%p655) target = $region108
        $region107: #{tpu_custom_call.1} parent=91 // pred_region
          %658 = dma.done [#allocation6], 16
        $region108: #{tpu_custom_call.1} parent=91 // pred_fallthru
          _
        // Predicated region
        $region109: #{tpu_custom_call.1} parent=91 // pred_check
          %p659 = pneg %p328
        $region110: #{tpu_custom_call.1} parent=91 // pred_check_branch
          %661 = sbr.rel (%p659) target = $region112
        $region111: #{tpu_custom_call.1} parent=91 // pred_region
          %662 = dma.done [#allocation12], 512
        $region112: #{tpu_custom_call.1} parent=91 // pred_fallthru
          _
        %663 = sfence
        %s664 = sand.u32 %s53, 1
        %s665 = scalar_lea.sflag [#allocation4], %s664
        %s666 = sand.u32 %s53, 1
        %s667 = smul.addr %s666, 8
        %s668 = scalar_lea.vmem [#allocation3], %s667
        %p669 = pneg %p66
        %p670 = pneg %p63
        %s671 = sand.u32 %s45, 1
        %s672 = scalar_lea.sflag [#allocation8], %s671
        %s673 = sand.u32 %s79, 1
        %s674 = smul.addr %s673, 8
        %s675 = scalar_lea.vmem [#allocation7], %s674
        %p676 = pneg %p92
        %p677 = pneg %p89
        %s678 = sand.u32 %s45, 1
        %s679 = scalar_lea.sflag [#allocation8], %s678
        %s680 = sand.u32 %s105, 1
        %s681 = smul.addr %s680, 8
        %s682 = scalar_lea.vmem [#allocation9], %s681
        %p683 = pneg %p118
        %p684 = pneg %p115
        %p685 = pneg %p139
        %p686 = pneg %p136
        %p687 = pneg %p160
        %p688 = pneg %p157
        %p689 = pneg %p181
        %p690 = pneg %p178
        %p691 = pneg %p202
        %p692 = pneg %p199
        %p693 = pneg %p223
        %p694 = pneg %p220
        %p695 = pneg %p244
        %p696 = pneg %p241
        %p697 = pneg %p265
        %p698 = pneg %p262
        %p699 = pneg %p286
        %p700 = pneg %p283
        %p701 = pneg %p307
        %p702 = pneg %p304
        %p703 = pneg %p328
        %p704 = pneg %p325
        %p705 = pneg %p349
        %p706 = pneg %p346
        %p707 = pneg %p370
        %p708 = pneg %p367
        %p709 = pneg %p391
        %p710 = pneg %p388
        %p711 = pneg %p412
        %p712 = pneg %p409
        %p713 = pneg %p433
        %p714 = pneg %p430
        %p715 = pneg %p459
        %p716 = pneg %p456
        %s717 = sand.u32 %s446, 1
        %s718 = scalar_lea.sflag [#allocation5], %s717
        %s719 = sand.u32 %s446, 1
        %s720 = smul.addr %s719, 8
        %s721 = scalar_lea.vmem [#allocation13], %s720
        %p722 = pneg %p485
        %p723 = pneg %p482
        %s724 = sand.u32 %s472, 1
        %s725 = scalar_lea.sflag [#allocation15], %s724
        %s726 = sand.u32 %s472, 1
        %s727 = smul.addr %s726, 16
        %s728 = scalar_lea.vmem [#allocation14], %s727
        %v729 = vld [vmem:[%s632] sm:$0xff]
        %v730 = vld [vmem:[%s641] sm:$0xff]
        %v731 = vld [vmem:[%s650] sm:$0xff]
        %v732 = vld [vmem:[%s3] sm:$0xff]
        %v733 = vld [vmem:[%s3 + $0x8] sm:$0xff]
        %v734 = vld [vmem:[%s3 + $0x10] sm:$0xff]
        %v735 = vld [vmem:[%s3 + $0x18] sm:$0xff]
        %v736 = vld [vmem:[%s5] sm:$0xff]
        %v737 = vld [vmem:[%s5 + $0x8] sm:$0xff]
        %v738 = vld [vmem:[%s5 + $0x10] sm:$0xff]
        %v739 = vld [vmem:[%s5 + $0x18] sm:$0xff]
        %v740 = vld [vmem:[%s4] sm:$0x1]
        %v742 = vlaneseq
        %v743 = vshrl.u32 %v742, 7
        %v744 = vsub.s32 0, %v743
        %v745 = vrot.slane %v740, %v744
        %vm747 = vcmask 261120
        %v749 = vsel %vm747, %v729, 0
        %751 = vmatprep.subr.mxu0 0.0
        %752 = vmatpush1.msra.mxu0 %v732
        %753 = vmatprep.subr.mxu0 0.0
        %754 = vmatpush1.msra.mxu0 %v733
        %755 = vmatprep.subr.mxu0 0.0
        %756 = vmatpush1.msra.mxu0 %v734
        %757 = vmatprep.subr.mxu0 0.0
        %758 = vmatpush1.msra.mxu0 %v735
        %759 = vmatprep.subr.mxu0 0.0
        %760 = vmatpush1.msra.mxu0 0.0
        %761 = vmatprep.subr.mxu0 0.0
        %762 = vmatpush1.msra.mxu0 0.0
        %763 = vmatprep.subr.mxu0 0.0
        %764 = vmatpush1.msra.mxu0 0.0
        %765 = vmatprep.subr.mxu0 0.0
        %766 = vmatpush1.msra.mxu0 0.0
        %767 = vmatprep.subr.mxu0 0.0
        %768 = vmatpush1.msra.mxu0 0.0
        %769 = vmatprep.subr.mxu0 0.0
        %770 = vmatpush1.msra.mxu0 0.0
        %771 = vmatprep.subr.mxu0 0.0
        %772 = vmatpush1.msra.mxu0 0.0
        %773 = vmatprep.subr.mxu0 0.0
        %774 = vmatpush1.msra.mxu0 0.0
        %775 = vmatprep.subr.mxu0 0.0
        %776 = vmatpush1.msra.mxu0 0.0
        %777 = vmatprep.subr.mxu0 0.0
        %778 = vmatpush1.msra.mxu0 0.0
        %779 = vmatprep.subr.mxu0 0.0
        %780 = vmatpush1.msra.mxu0 0.0
        %781 = vmatprep.subr.mxu0 0.0
        %782 = vmatpush1.msra.mxu0 0.0
        %783 = vmatprep.subr.mxu0 0.0
        %784 = vmatpush1.msra.mxu0 0.0
        %785 = vmatprep.subr.mxu0 0.0
        %786 = vmatpush1.msra.mxu0 0.0
        %787 = vmatprep.subr.mxu0 0.0
        %788 = vmatpush1.msra.mxu0 0.0
        %789 = vmatprep.subr.mxu0 0.0
        %790 = vmatpush1.msra.mxu0 0.0
        %791 = vmatprep.subr.mxu0 0.0
        %792 = vmatpush1.msra.mxu0 0.0
        %793 = vmatprep.subr.mxu0 0.0
        %794 = vmatpush1.msra.mxu0 0.0
        %795 = vmatprep.subr.mxu0 0.0
        %796 = vmatpush1.msra.mxu0 0.0
        %797 = vmatprep.subr.mxu0 0.0
        %798 = vmatpush1.msra.mxu0 0.0
        %799 = vmatprep.subr.mxu0 0.0
        %800 = vmatpush1.msra.mxu0 0.0
        %801 = vmatprep.subr.mxu0 0.0
        %802 = vmatpush1.msra.mxu0 0.0
        %803 = vmatprep.subr.mxu0 0.0
        %804 = vmatpush1.msra.mxu0 0.0
        %805 = vmatprep.subr.mxu0 0.0
        %806 = vmatpush1.msra.mxu0 0.0
        %807 = vmatprep.subr.mxu0 0.0
        %808 = vmatpush1.msra.mxu0 0.0
        %809 = vmatprep.subr.mxu0 0.0
        %810 = vmatpush1.msra.mxu0 0.0
        %811 = vmatprep.subr.mxu0 0.0
        %812 = vmatpush1.msra.mxu0 0.0
        %813 = vmatprep.subr.mxu0 0.0
        %814 = vmatpush1.msra.mxu0 0.0
        %815 = vmatprep.mubr.f32.mxu0 0.0
        %816 = vmatmul.mubr.f32.gmra.mrb[0].mxu0 %v749
        %v817 = vpop.f32.mrb[0].mxu0
        %v818 = vadd.f32 %v745, %v817
        %v819 = vpop.f32.mrb[0].mxu0
        %820 = vdwg.mxu0
        %v822 = vsel %vm747, %v730, 0
        %824 = vmatprep.subr.mxu0 0.0
        %825 = vmatpush1.msra.mxu0 %v732
        %826 = vmatprep.subr.mxu0 0.0
        %827 = vmatpush1.msra.mxu0 %v733
        %828 = vmatprep.subr.mxu0 0.0
        %829 = vmatpush1.msra.mxu0 %v734
        %830 = vmatprep.subr.mxu0 0.0
        %831 = vmatpush1.msra.mxu0 %v735
        %832 = vmatprep.subr.mxu0 0.0
        %833 = vmatpush1.msra.mxu0 0.0
        %834 = vmatprep.subr.mxu0 0.0
        %835 = vmatpush1.msra.mxu0 0.0
        %836 = vmatprep.subr.mxu0 0.0
        %837 = vmatpush1.msra.mxu0 0.0
        %838 = vmatprep.subr.mxu0 0.0
        %839 = vmatpush1.msra.mxu0 0.0
        %840 = vmatprep.subr.mxu0 0.0
        %841 = vmatpush1.msra.mxu0 0.0
        %842 = vmatprep.subr.mxu0 0.0
        %843 = vmatpush1.msra.mxu0 0.0
        %844 = vmatprep.subr.mxu0 0.0
        %845 = vmatpush1.msra.mxu0 0.0
        %846 = vmatprep.subr.mxu0 0.0
        %847 = vmatpush1.msra.mxu0 0.0
        %848 = vmatprep.subr.mxu0 0.0
        %849 = vmatpush1.msra.mxu0 0.0
        %850 = vmatprep.subr.mxu0 0.0
        %851 = vmatpush1.msra.mxu0 0.0
        %852 = vmatprep.subr.mxu0 0.0
        %853 = vmatpush1.msra.mxu0 0.0
        %854 = vmatprep.subr.mxu0 0.0
        %855 = vmatpush1.msra.mxu0 0.0
        %856 = vmatprep.subr.mxu0 0.0
        %857 = vmatpush1.msra.mxu0 0.0
        %858 = vmatprep.subr.mxu0 0.0
        %859 = vmatpush1.msra.mxu0 0.0
        %860 = vmatprep.subr.mxu0 0.0
        %861 = vmatpush1.msra.mxu0 0.0
        %862 = vmatprep.subr.mxu0 0.0
        %863 = vmatpush1.msra.mxu0 0.0
        %864 = vmatprep.subr.mxu0 0.0
        %865 = vmatpush1.msra.mxu0 0.0
        %866 = vmatprep.subr.mxu0 0.0
        %867 = vmatpush1.msra.mxu0 0.0
        %868 = vmatprep.subr.mxu0 0.0
        %869 = vmatpush1.msra.mxu0 0.0
        %870 = vmatprep.subr.mxu0 0.0
        %871 = vmatpush1.msra.mxu0 0.0
        %872 = vmatprep.subr.mxu0 0.0
        %873 = vmatpush1.msra.mxu0 0.0
        %874 = vmatprep.subr.mxu0 0.0
        %875 = vmatpush1.msra.mxu0 0.0
        %876 = vmatprep.subr.mxu0 0.0
        %877 = vmatpush1.msra.mxu0 0.0
        %878 = vmatprep.subr.mxu0 0.0
        %879 = vmatpush1.msra.mxu0 0.0
        %880 = vmatprep.subr.mxu0 0.0
        %881 = vmatpush1.msra.mxu0 0.0
        %882 = vmatprep.subr.mxu0 0.0
        %883 = vmatpush1.msra.mxu0 0.0
        %884 = vmatprep.subr.mxu0 0.0
        %885 = vmatpush1.msra.mxu0 0.0
        %886 = vmatprep.subr.mxu0 0.0
        %887 = vmatpush1.msra.mxu0 0.0
        %888 = vmatprep.mubr.f32.mxu0 0.0
        %889 = vmatmul.mubr.f32.gmra.mrb[0].mxu0 %v822
        %v890 = vpop.f32.mrb[0].mxu0
        %v891 = vadd.f32 %v745, %v890
        %v892 = vpop.f32.mrb[0].mxu0
        %893 = vdwg.mxu0
        %v894 = vld [vmem:[%s6] sm:$0x1]
        %v896 = vlaneseq
        %v897 = vshrl.u32 %v896, 7
        %v898 = vsub.s32 0, %v897
        %v899 = vrot.slane %v894, %v898
        %v902 = vsel %vm747, %v731, 0
        %904 = vmatprep.subr.mxu0 0.0
        %905 = vmatpush1.msra.mxu0 %v736
        %906 = vmatprep.subr.mxu0 0.0
        %907 = vmatpush1.msra.mxu0 %v737
        %908 = vmatprep.subr.mxu0 0.0
        %909 = vmatpush1.msra.mxu0 %v738
        %910 = vmatprep.subr.mxu0 0.0
        %911 = vmatpush1.msra.mxu0 %v739
        %912 = vmatprep.subr.mxu0 0.0
        %913 = vmatpush1.msra.mxu0 0.0
        %914 = vmatprep.subr.mxu0 0.0
        %915 = vmatpush1.msra.mxu0 0.0
        %916 = vmatprep.subr.mxu0 0.0
        %917 = vmatpush1.msra.mxu0 0.0
        %918 = vmatprep.subr.mxu0 0.0
        %919 = vmatpush1.msra.mxu0 0.0
        %920 = vmatprep.subr.mxu0 0.0
        %921 = vmatpush1.msra.mxu0 0.0
        %922 = vmatprep.subr.mxu0 0.0
        %923 = vmatpush1.msra.mxu0 0.0
        %924 = vmatprep.subr.mxu0 0.0
        %925 = vmatpush1.msra.mxu0 0.0
        %926 = vmatprep.subr.mxu0 0.0
        %927 = vmatpush1.msra.mxu0 0.0
        %928 = vmatprep.subr.mxu0 0.0
        %929 = vmatpush1.msra.mxu0 0.0
        %930 = vmatprep.subr.mxu0 0.0
        %931 = vmatpush1.msra.mxu0 0.0
        %932 = vmatprep.subr.mxu0 0.0
        %933 = vmatpush1.msra.mxu0 0.0
        %934 = vmatprep.subr.mxu0 0.0
        %935 = vmatpush1.msra.mxu0 0.0
        %936 = vmatprep.subr.mxu0 0.0
        %937 = vmatpush1.msra.mxu0 0.0
        %938 = vmatprep.subr.mxu0 0.0
        %939 = vmatpush1.msra.mxu0 0.0
        %940 = vmatprep.subr.mxu0 0.0
        %941 = vmatpush1.msra.mxu0 0.0
        %942 = vmatprep.subr.mxu0 0.0
        %943 = vmatpush1.msra.mxu0 0.0
        %944 = vmatprep.subr.mxu0 0.0
        %945 = vmatpush1.msra.mxu0 0.0
        %946 = vmatprep.subr.mxu0 0.0
        %947 = vmatpush1.msra.mxu0 0.0
        %948 = vmatprep.subr.mxu0 0.0
        %949 = vmatpush1.msra.mxu0 0.0
        %950 = vmatprep.subr.mxu0 0.0
        %951 = vmatpush1.msra.mxu0 0.0
        %952 = vmatprep.subr.mxu0 0.0
        %953 = vmatpush1.msra.mxu0 0.0
        %954 = vmatprep.subr.mxu0 0.0
        %955 = vmatpush1.msra.mxu0 0.0
        %956 = vmatprep.subr.mxu0 0.0
        %957 = vmatpush1.msra.mxu0 0.0
        %958 = vmatprep.subr.mxu0 0.0
        %959 = vmatpush1.msra.mxu0 0.0
        %960 = vmatprep.subr.mxu0 0.0
        %961 = vmatpush1.msra.mxu0 0.0
        %962 = vmatprep.subr.mxu0 0.0
        %963 = vmatpush1.msra.mxu0 0.0
        %964 = vmatprep.subr.mxu0 0.0
        %965 = vmatpush1.msra.mxu0 0.0
        %966 = vmatprep.subr.mxu0 0.0
        %967 = vmatpush1.msra.mxu0 0.0
        %968 = vmatprep.mubr.f32.mxu0 0.0
        %969 = vmatmul.mubr.f32.gmra.mrb[0].mxu0 %v902
        %v970 = vpop.f32.mrb[0].mxu0
        %v971 = vadd.f32 %v899, %v970
        %v972 = vpop.f32.mrb[0].mxu0
        %973 = vdwg.mxu0
        %v974 = vlaneseq
        %v975 = vshrl.u32 %v974, 7
        %v976 = vlaneseq
        %v977 = vand.u32 %v976, 127
        %v978 = vsub.s32 %v977, %v975
        %vm979 = vcmp.lt.s32.totalorder %v978, 1
        %v980 = vsel %vm979, 1, 0
        %v981 = vcvt.s32.f32 %v980
        %v982 = vcvt.s32.f32 %v978
        %v983 = vand.u32 2147483647, %v982
        %vm984 = vcmp.le.s32.totalorder %v975, %v977
        %v985 = vsel %vm984, 1, 0
        %v986 = vcvt.s32.f32 %v985
        %vm987 = vcmask 130048
        %v989 = vsel %vm987, %v818, 0
        %v992 = vsel %vm987, %v891, 0
        %994 = vmatprep.subr.mxu0 0.0
        %995 = vmatpush1.xpose.msra.mxu0 %v992
        %996 = vmatprep.subr.mxu0 0.0
        %997 = vmatpush1.xpose.msra.mxu0 0.0
        %998 = vmatprep.subr.mxu0 0.0
        %999 = vmatpush1.xpose.msra.mxu0 0.0
        %1000 = vmatprep.subr.mxu0 0.0
        %1001 = vmatpush1.xpose.msra.mxu0 0.0
        %1002 = vmatprep.subr.mxu0 0.0
        %1003 = vmatpush1.xpose.msra.mxu0 0.0
        %1004 = vmatprep.subr.mxu0 0.0
        %1005 = vmatpush1.xpose.msra.mxu0 0.0
        %1006 = vmatprep.subr.mxu0 0.0
        %1007 = vmatpush1.xpose.msra.mxu0 0.0
        %1008 = vmatprep.subr.mxu0 0.0
        %1009 = vmatpush1.xpose.msra.mxu0 0.0
        %1010 = vmatprep.subr.mxu0 0.0
        %1011 = vmatpush1.xpose.msra.mxu0 0.0
        %1012 = vmatprep.subr.mxu0 0.0
        %1013 = vmatpush1.xpose.msra.mxu0 0.0
        %1014 = vmatprep.subr.mxu0 0.0
        %1015 = vmatpush1.xpose.msra.mxu0 0.0
        %1016 = vmatprep.subr.mxu0 0.0
        %1017 = vmatpush1.xpose.msra.mxu0 0.0
        %1018 = vmatprep.subr.mxu0 0.0
        %1019 = vmatpush1.xpose.msra.mxu0 0.0
        %1020 = vmatprep.subr.mxu0 0.0
        %1021 = vmatpush1.xpose.msra.mxu0 0.0
        %1022 = vmatprep.subr.mxu0 0.0
        %1023 = vmatpush1.xpose.msra.mxu0 0.0
        %1024 = vmatprep.subr.mxu0 0.0
        %1025 = vmatpush1.xpose.msra.mxu0 0.0
        %1026 = vmatprep.subr.mxu0 0.0
        %1027 = vmatpush1.xpose.msra.mxu0 0.0
        %1028 = vmatprep.subr.mxu0 0.0
        %1029 = vmatpush1.xpose.msra.mxu0 0.0
        %1030 = vmatprep.subr.mxu0 0.0
        %1031 = vmatpush1.xpose.msra.mxu0 0.0
        %1032 = vmatprep.subr.mxu0 0.0
        %1033 = vmatpush1.xpose.msra.mxu0 0.0
        %1034 = vmatprep.subr.mxu0 0.0
        %1035 = vmatpush1.xpose.msra.mxu0 0.0
        %1036 = vmatprep.subr.mxu0 0.0
        %1037 = vmatpush1.xpose.msra.mxu0 0.0
        %1038 = vmatprep.subr.mxu0 0.0
        %1039 = vmatpush1.xpose.msra.mxu0 0.0
        %1040 = vmatprep.subr.mxu0 0.0
        %1041 = vmatpush1.xpose.msra.mxu0 0.0
        %1042 = vmatprep.subr.mxu0 0.0
        %1043 = vmatpush1.xpose.msra.mxu0 0.0
        %1044 = vmatprep.subr.mxu0 0.0
        %1045 = vmatpush1.xpose.msra.mxu0 0.0
        %1046 = vmatprep.subr.mxu0 0.0
        %1047 = vmatpush1.xpose.msra.mxu0 0.0
        %1048 = vmatprep.subr.mxu0 0.0
        %1049 = vmatpush1.xpose.msra.mxu0 0.0
        %1050 = vmatprep.subr.mxu0 0.0
        %1051 = vmatpush1.xpose.msra.mxu0 0.0
        %1052 = vmatprep.subr.mxu0 0.0
        %1053 = vmatpush1.xpose.msra.mxu0 0.0
        %1054 = vmatprep.subr.mxu0 0.0
        %1055 = vmatpush1.xpose.msra.mxu0 0.0
        %1056 = vmatprep.subr.mxu0 0.0
        %1057 = vmatpush1.xpose.msra.mxu0 0.0
        %1058 = vmatprep.mubr.f32.mxu0 0.0
        %1059 = vmatmul.mubr.f32.gmra.mrb[0].mxu0 %v989
        %v1060 = vpop.f32.mrb[0].mxu0
        %v1061 = vadd.f32 0.0, %v1060
        %v1062 = vpop.f32.mrb[0].mxu0
        %1063 = vdwg.mxu0
        %v1064 = vmul.f32 %v1061, 0.25
        %v1065 = vsel %vm979, %v1064, -1e+32
        %vm1066 = vcmask 64512
        %v1067 = vsel %vm1066, %v1065, -inf
        %1068 = vmax.xlane.f32.xlu0 %v1067
        %v1069 = vpop.xlane.xlu0 %1068
        %v1070 = vsub.f32 %v1065, %v1069
        %v1071 = vmul.f32 %v1070, 1.442695
        %v1072 = vpow.pop %v1071
        %v1073 = vsel %vm1066, %v1072, 0.0
        %1074 = vadd.xlane.f32.xlu0 %v1073
        %v1075 = vpop.xlane.xlu0 %1074
        %v1076 = vrcp.pop %v1075
        %v1077 = vmul.f32 %v1072, %v1076
        %v1078 = vmul.f32 %v1077, %v981
        %v1080 = vsel %vm1066, %v1078, 0
        %1082 = vmatprep.subr.mxu0 0.0
        %1083 = vmatpush1.msra.mxu0 %v986
        %1084 = vmatprep.subr.mxu0 0.0
        %1085 = vmatpush1.msra.mxu0 0.0
        %1086 = vmatprep.subr.mxu0 0.0
        %1087 = vmatpush1.msra.mxu0 0.0
        %1088 = vmatprep.subr.mxu0 0.0
        %1089 = vmatpush1.msra.mxu0 0.0
        %1090 = vmatprep.subr.mxu0 0.0
        %1091 = vmatpush1.msra.mxu0 0.0
        %1092 = vmatprep.subr.mxu0 0.0
        %1093 = vmatpush1.msra.mxu0 0.0
        %1094 = vmatprep.subr.mxu0 0.0
        %1095 = vmatpush1.msra.mxu0 0.0
        %1096 = vmatprep.subr.mxu0 0.0
        %1097 = vmatpush1.msra.mxu0 0.0
        %1098 = vmatprep.subr.mxu0 0.0
        %1099 = vmatpush1.msra.mxu0 0.0
        %1100 = vmatprep.subr.mxu0 0.0
        %1101 = vmatpush1.msra.mxu0 0.0
        %1102 = vmatprep.subr.mxu0 0.0
        %1103 = vmatpush1.msra.mxu0 0.0
        %1104 = vmatprep.subr.mxu0 0.0
        %1105 = vmatpush1.msra.mxu0 0.0
        %1106 = vmatprep.subr.mxu0 0.0
        %1107 = vmatpush1.msra.mxu0 0.0
        %1108 = vmatprep.subr.mxu0 0.0
        %1109 = vmatpush1.msra.mxu0 0.0
        %1110 = vmatprep.subr.mxu0 0.0
        %1111 = vmatpush1.msra.mxu0 0.0
        %1112 = vmatprep.subr.mxu0 0.0
        %1113 = vmatpush1.msra.mxu0 0.0
        %1114 = vmatprep.subr.mxu0 0.0
        %1115 = vmatpush1.msra.mxu0 0.0
        %1116 = vmatprep.subr.mxu0 0.0
        %1117 = vmatpush1.msra.mxu0 0.0
        %1118 = vmatprep.subr.mxu0 0.0
        %1119 = vmatpush1.msra.mxu0 0.0
        %1120 = vmatprep.subr.mxu0 0.0
        %1121 = vmatpush1.msra.mxu0 0.0
        %1122 = vmatprep.subr.mxu0 0.0
        %1123 = vmatpush1.msra.mxu0 0.0
        %1124 = vmatprep.subr.mxu0 0.0
        %1125 = vmatpush1.msra.mxu0 0.0
        %1126 = vmatprep.subr.mxu0 0.0
        %1127 = vmatpush1.msra.mxu0 0.0
        %1128 = vmatprep.subr.mxu0 0.0
        %1129 = vmatpush1.msra.mxu0 0.0
        %1130 = vmatprep.subr.mxu0 0.0
        %1131 = vmatpush1.msra.mxu0 0.0
        %1132 = vmatprep.subr.mxu0 0.0
        %1133 = vmatpush1.msra.mxu0 0.0
        %1134 = vmatprep.subr.mxu0 0.0
        %1135 = vmatpush1.msra.mxu0 0.0
        %1136 = vmatprep.subr.mxu0 0.0
        %1137 = vmatpush1.msra.mxu0 0.0
        %1138 = vmatprep.subr.mxu0 0.0
        %1139 = vmatpush1.msra.mxu0 0.0
        %1140 = vmatprep.subr.mxu0 0.0
        %1141 = vmatpush1.msra.mxu0 0.0
        %1142 = vmatprep.subr.mxu0 0.0
        %1143 = vmatpush1.msra.mxu0 0.0
        %1144 = vmatprep.subr.mxu0 0.0
        %1145 = vmatpush1.msra.mxu0 0.0
        %1146 = vmatprep.mubr.f32.mxu0 0.0
        %1147 = vmatmul.mubr.f32.gmra.mrb[0].mxu0 %v1080
        %v1148 = vpop.f32.mrb[0].mxu0
        %v1149 = vadd.f32 0.0, %v1148
        %v1150 = vpop.f32.mrb[0].mxu0
        %1151 = vdwg.mxu0
        %v1152 = vsel %vm1066, %v1078, 0.0
        %1153 = vadd.xlane.f32.xlu0 %v1152
        %v1154 = vpop.xlane.xlu0 %1153
        %v1155 = vsub.f32 %v1154, %v1149
        %v1156 = vmul.f32 %v1155, %v983
        %v1157 = vmax.f32 %v1156, 0.0
        %v1158 = vrsqrt.pop %v1157
        %v1159 = vmul.f32 %v1157, %v1158
        %vm1160 = vcmp.eq.f32.partialorder %v1157, inf
        %v1161 = vsel %vm1160, %v1157, %v1159
        %vm1162 = vcmp.eq.f32.partialorder %v1157, 0.0
        %v1163 = vand.u32 %v1157, 2147483648
        %v1164 = vsel %vm1162, %v1163, %v1161
        %s1165 = sld [smem:[#allocation10]]
        %v1166 = vstv %s1165
        %v1167 = vmul.f32 %v1164, %v1166
        %v1168 = vmul.f32 %v1167, 1.442695
        %v1169 = vpow.pop %v1168
        %v1170 = vmax.f32 %v1169, 1e-05
        %v1171 = vmin.f32 %v1170, 100000.0
        %v1172 = vmul.f32 %v1064, %v1171
        %v1173 = vsel %vm979, %v1172, -1e+32
        %v1174 = vsel %vm1066, %v1173, -inf
        %1175 = vmax.xlane.f32.xlu0 %v1174
        %v1176 = vpop.xlane.xlu0 %1175
        %v1177 = vsub.f32 %v1173, %v1176
        %v1178 = vmul.f32 %v1177, 1.442695
        %v1179 = vpow.pop %v1178
        %v1180 = vsel %vm1066, %v1179, 0.0
        %1181 = vadd.xlane.f32.xlu0 %v1180
        %v1182 = vpop.xlane.xlu0 %1181
        %v1183 = vrcp.pop %v1182
        %v1184 = vmul.f32 %v1179, %v1183
        %1185 = vst.msk [vmem:[%s728] sm:$0xff] %vm1066, %v1184
        %v1187 = vsel %vm1066, %v1184, 0
        %1189 = vmatprep.subr.mxu0 0.0
        %1190 = vmatpush1.msra.mxu0 %v971
        %1191 = vmatprep.subr.mxu0 0.0
        %1192 = vmatpush1.msra.mxu0 0.0
        %1193 = vmatprep.subr.mxu0 0.0
        %1194 = vmatpush1.msra.mxu0 0.0
        %1195 = vmatprep.subr.mxu0 0.0
        %1196 = vmatpush1.msra.mxu0 0.0
        %1197 = vmatprep.subr.mxu0 0.0
        %1198 = vmatpush1.msra.mxu0 0.0
        %1199 = vmatprep.subr.mxu0 0.0
        %1200 = vmatpush1.msra.mxu0 0.0
        %1201 = vmatprep.subr.mxu0 0.0
        %1202 = vmatpush1.msra.mxu0 0.0
        %1203 = vmatprep.subr.mxu0 0.0
        %1204 = vmatpush1.msra.mxu0 0.0
        %1205 = vmatprep.subr.mxu0 0.0
        %1206 = vmatpush1.msra.mxu0 0.0
        %1207 = vmatprep.subr.mxu0 0.0
        %1208 = vmatpush1.msra.mxu0 0.0
        %1209 = vmatprep.subr.mxu0 0.0
        %1210 = vmatpush1.msra.mxu0 0.0
        %1211 = vmatprep.subr.mxu0 0.0
        %1212 = vmatpush1.msra.mxu0 0.0
        %1213 = vmatprep.subr.mxu0 0.0
        %1214 = vmatpush1.msra.mxu0 0.0
        %1215 = vmatprep.subr.mxu0 0.0
        %1216 = vmatpush1.msra.mxu0 0.0
        %1217 = vmatprep.subr.mxu0 0.0
        %1218 = vmatpush1.msra.mxu0 0.0
        %1219 = vmatprep.subr.mxu0 0.0
        %1220 = vmatpush1.msra.mxu0 0.0
        %1221 = vmatprep.subr.mxu0 0.0
        %1222 = vmatpush1.msra.mxu0 0.0
        %1223 = vmatprep.subr.mxu0 0.0
        %1224 = vmatpush1.msra.mxu0 0.0
        %1225 = vmatprep.subr.mxu0 0.0
        %1226 = vmatpush1.msra.mxu0 0.0
        %1227 = vmatprep.subr.mxu0 0.0
        %1228 = vmatpush1.msra.mxu0 0.0
        %1229 = vmatprep.subr.mxu0 0.0
        %1230 = vmatpush1.msra.mxu0 0.0
        %1231 = vmatprep.subr.mxu0 0.0
        %1232 = vmatpush1.msra.mxu0 0.0
        %1233 = vmatprep.subr.mxu0 0.0
        %1234 = vmatpush1.msra.mxu0 0.0
        %1235 = vmatprep.subr.mxu0 0.0
        %1236 = vmatpush1.msra.mxu0 0.0
        %1237 = vmatprep.subr.mxu0 0.0
        %1238 = vmatpush1.msra.mxu0 0.0
        %1239 = vmatprep.subr.mxu0 0.0
        %1240 = vmatpush1.msra.mxu0 0.0
        %1241 = vmatprep.subr.mxu0 0.0
        %1242 = vmatpush1.msra.mxu0 0.0
        %1243 = vmatprep.subr.mxu0 0.0
        %1244 = vmatpush1.msra.mxu0 0.0
        %1245 = vmatprep.subr.mxu0 0.0
        %1246 = vmatpush1.msra.mxu0 0.0
        %1247 = vmatprep.subr.mxu0 0.0
        %1248 = vmatpush1.msra.mxu0 0.0
        %1249 = vmatprep.subr.mxu0 0.0
        %1250 = vmatpush1.msra.mxu0 0.0
        %1251 = vmatprep.subr.mxu0 0.0
        %1252 = vmatpush1.msra.mxu0 0.0
        %1253 = vmatprep.mubr.f32.mxu0 0.0
        %1254 = vmatmul.mubr.f32.gmra.mrb[0].mxu0 %v1187
        %v1255 = vpop.f32.mrb[0].mxu0
        %v1256 = vadd.f32 0.0, %v1255
        %v1257 = vpop.f32.mrb[0].mxu0
        %1258 = vdwg.mxu0
        %1259 = vst.msk [vmem:[#allocation2] sm:$0xff] %vm987, %v1256
        %1260 = vrot.lane.b32.xlu0 %v818, 112
        %v1261 = vpop.permute.xlu0 %1260
        %1262 = vrot.lane.b32.xlu0 %v891, 112
        %v1263 = vpop.permute.xlu0 %1262
        %v1264 = vsel %vm987, %v1261, 0
        %v1266 = vsel %vm987, %v1263, 0
        %1268 = vmatprep.subr.mxu0 0.0
        %1269 = vmatpush1.xpose.msra.mxu0 %v1266
        %1270 = vmatprep.subr.mxu0 0.0
        %1271 = vmatpush1.xpose.msra.mxu0 0.0
        %1272 = vmatprep.subr.mxu0 0.0
        %1273 = vmatpush1.xpose.msra.mxu0 0.0
        %1274 = vmatprep.subr.mxu0 0.0
        %1275 = vmatpush1.xpose.msra.mxu0 0.0
        %1276 = vmatprep.subr.mxu0 0.0
        %1277 = vmatpush1.xpose.msra.mxu0 0.0
        %1278 = vmatprep.subr.mxu0 0.0
        %1279 = vmatpush1.xpose.msra.mxu0 0.0
        %1280 = vmatprep.subr.mxu0 0.0
        %1281 = vmatpush1.xpose.msra.mxu0 0.0
        %1282 = vmatprep.subr.mxu0 0.0
        %1283 = vmatpush1.xpose.msra.mxu0 0.0
        %1284 = vmatprep.subr.mxu0 0.0
        %1285 = vmatpush1.xpose.msra.mxu0 0.0
        %1286 = vmatprep.subr.mxu0 0.0
        %1287 = vmatpush1.xpose.msra.mxu0 0.0
        %1288 = vmatprep.subr.mxu0 0.0
        %1289 = vmatpush1.xpose.msra.mxu0 0.0
        %1290 = vmatprep.subr.mxu0 0.0
        %1291 = vmatpush1.xpose.msra.mxu0 0.0
        %1292 = vmatprep.subr.mxu0 0.0
        %1293 = vmatpush1.xpose.msra.mxu0 0.0
        %1294 = vmatprep.subr.mxu0 0.0
        %1295 = vmatpush1.xpose.msra.mxu0 0.0
        %1296 = vmatprep.subr.mxu0 0.0
        %1297 = vmatpush1.xpose.msra.mxu0 0.0
        %1298 = vmatprep.subr.mxu0 0.0
        %1299 = vmatpush1.xpose.msra.mxu0 0.0
        %1300 = vmatprep.subr.mxu0 0.0
        %1301 = vmatpush1.xpose.msra.mxu0 0.0
        %1302 = vmatprep.subr.mxu0 0.0
        %1303 = vmatpush1.xpose.msra.mxu0 0.0
        %1304 = vmatprep.subr.mxu0 0.0
        %1305 = vmatpush1.xpose.msra.mxu0 0.0
        %1306 = vmatprep.subr.mxu0 0.0
        %1307 = vmatpush1.xpose.msra.mxu0 0.0
        %1308 = vmatprep.subr.mxu0 0.0
        %1309 = vmatpush1.xpose.msra.mxu0 0.0
        %1310 = vmatprep.subr.mxu0 0.0
        %1311 = vmatpush1.xpose.msra.mxu0 0.0
        %1312 = vmatprep.subr.mxu0 0.0
        %1313 = vmatpush1.xpose.msra.mxu0 0.0
        %1314 = vmatprep.subr.mxu0 0.0
        %1315 = vmatpush1.xpose.msra.mxu0 0.0
        %1316 = vmatprep.subr.mxu0 0.0
        %1317 = vmatpush1.xpose.msra.mxu0 0.0
        %1318 = vmatprep.subr.mxu0 0.0
        %1319 = vmatpush1.xpose.msra.mxu0 0.0
        %1320 = vmatprep.subr.mxu0 0.0
        %1321 = vmatpush1.xpose.msra.mxu0 0.0
        %1322 = vmatprep.subr.mxu0 0.0
        %1323 = vmatpush1.xpose.msra.mxu0 0.0
        %1324 = vmatprep.subr.mxu0 0.0
        %1325 = vmatpush1.xpose.msra.mxu0 0.0
        %1326 = vmatprep.subr.mxu0 0.0
        %1327 = vmatpush1.xpose.msra.mxu0 0.0
        %1328 = vmatprep.subr.mxu0 0.0
        %1329 = vmatpush1.xpose.msra.mxu0 0.0
        %1330 = vmatprep.subr.mxu0 0.0
        %1331 = vmatpush1.xpose.msra.mxu0 0.0
        %1332 = vmatprep.mubr.f32.mxu0 0.0
        %1333 = vmatmul.mubr.f32.gmra.mrb[0].mxu0 %v1264
        %v1334 = vpop.f32.mrb[0].mxu0
        %v1335 = vadd.f32 0.0, %v1334
        %v1336 = vpop.f32.mrb[0].mxu0
        %1337 = vdwg.mxu0
        %v1338 = vmul.f32 %v1335, 0.25
        %v1339 = vsel %vm979, %v1338, -1e+32
        %v1340 = vsel %vm1066, %v1339, -inf
        %1341 = vmax.xlane.f32.xlu0 %v1340
        %v1342 = vpop.xlane.xlu0 %1341
        %v1343 = vsub.f32 %v1339, %v1342
        %v1344 = vmul.f32 %v1343, 1.442695
        %v1345 = vpow.pop %v1344
        %v1346 = vsel %vm1066, %v1345, 0.0
        %1347 = vadd.xlane.f32.xlu0 %v1346
        %v1348 = vpop.xlane.xlu0 %1347
        %v1349 = vrcp.pop %v1348
        %v1350 = vmul.f32 %v1345, %v1349
        %v1351 = vmul.f32 %v1350, %v981
        %v1353 = vsel %vm1066, %v1351, 0
        %1355 = vmatprep.subr.mxu0 0.0
        %1356 = vmatpush1.msra.mxu0 %v986
        %1357 = vmatprep.subr.mxu0 0.0
        %1358 = vmatpush1.msra.mxu0 0.0
        %1359 = vmatprep.subr.mxu0 0.0
        %1360 = vmatpush1.msra.mxu0 0.0
        %1361 = vmatprep.subr.mxu0 0.0
        %1362 = vmatpush1.msra.mxu0 0.0
        %1363 = vmatprep.subr.mxu0 0.0
        %1364 = vmatpush1.msra.mxu0 0.0
        %1365 = vmatprep.subr.mxu0 0.0
        %1366 = vmatpush1.msra.mxu0 0.0
        %1367 = vmatprep.subr.mxu0 0.0
        %1368 = vmatpush1.msra.mxu0 0.0
        %1369 = vmatprep.subr.mxu0 0.0
        %1370 = vmatpush1.msra.mxu0 0.0
        %1371 = vmatprep.subr.mxu0 0.0
        %1372 = vmatpush1.msra.mxu0 0.0
        %1373 = vmatprep.subr.mxu0 0.0
        %1374 = vmatpush1.msra.mxu0 0.0
        %1375 = vmatprep.subr.mxu0 0.0
        %1376 = vmatpush1.msra.mxu0 0.0
        %1377 = vmatprep.subr.mxu0 0.0
        %1378 = vmatpush1.msra.mxu0 0.0
        %1379 = vmatprep.subr.mxu0 0.0
        %1380 = vmatpush1.msra.mxu0 0.0
        %1381 = vmatprep.subr.mxu0 0.0
        %1382 = vmatpush1.msra.mxu0 0.0
        %1383 = vmatprep.subr.mxu0 0.0
        %1384 = vmatpush1.msra.mxu0 0.0
        %1385 = vmatprep.subr.mxu0 0.0
        %1386 = vmatpush1.msra.mxu0 0.0
        %1387 = vmatprep.subr.mxu0 0.0
        %1388 = vmatpush1.msra.mxu0 0.0
        %1389 = vmatprep.subr.mxu0 0.0
        %1390 = vmatpush1.msra.mxu0 0.0
        %1391 = vmatprep.subr.mxu0 0.0
        %1392 = vmatpush1.msra.mxu0 0.0
        %1393 = vmatprep.subr.mxu0 0.0
        %1394 = vmatpush1.msra.mxu0 0.0
        %1395 = vmatprep.subr.mxu0 0.0
        %1396 = vmatpush1.msra.mxu0 0.0
        %1397 = vmatprep.subr.mxu0 0.0
        %1398 = vmatpush1.msra.mxu0 0.0
        %1399 = vmatprep.subr.mxu0 0.0
        %1400 = vmatpush1.msra.mxu0 0.0
        %1401 = vmatprep.subr.mxu0 0.0
        %1402 = vmatpush1.msra.mxu0 0.0
        %1403 = vmatprep.subr.mxu0 0.0
        %1404 = vmatpush1.msra.mxu0 0.0
        %1405 = vmatprep.subr.mxu0 0.0
        %1406 = vmatpush1.msra.mxu0 0.0
        %1407 = vmatprep.subr.mxu0 0.0
        %1408 = vmatpush1.msra.mxu0 0.0
        %1409 = vmatprep.subr.mxu0 0.0
        %1410 = vmatpush1.msra.mxu0 0.0
        %1411 = vmatprep.subr.mxu0 0.0
        %1412 = vmatpush1.msra.mxu0 0.0
        %1413 = vmatprep.subr.mxu0 0.0
        %1414 = vmatpush1.msra.mxu0 0.0
        %1415 = vmatprep.subr.mxu0 0.0
        %1416 = vmatpush1.msra.mxu0 0.0
        %1417 = vmatprep.subr.mxu0 0.0
        %1418 = vmatpush1.msra.mxu0 0.0
        %1419 = vmatprep.mubr.f32.mxu0 0.0
        %1420 = vmatmul.mubr.f32.gmra.mrb[0].mxu0 %v1353
        %v1421 = vpop.f32.mrb[0].mxu0
        %v1422 = vadd.f32 0.0, %v1421
        %v1423 = vpop.f32.mrb[0].mxu0
        %1424 = vdwg.mxu0
        %v1425 = vsel %vm1066, %v1351, 0.0
        %1426 = vadd.xlane.f32.xlu0 %v1425
        %v1427 = vpop.xlane.xlu0 %1426
        %v1428 = vsub.f32 %v1427, %v1422
        %v1429 = vmul.f32 %v1428, %v983
        %v1430 = vmax.f32 %v1429, 0.0
        %v1431 = vrsqrt.pop %v1430
        %v1432 = vmul.f32 %v1430, %v1431
        %vm1433 = vcmp.eq.f32.partialorder %v1430, inf
        %v1434 = vsel %vm1433, %v1430, %v1432
        %vm1435 = vcmp.eq.f32.partialorder %v1430, 0.0
        %v1436 = vand.u32 %v1430, 2147483648
        %v1437 = vsel %vm1435, %v1436, %v1434
        %s1438 = sld [smem:[#allocation10 + $0x1]]
        %v1439 = vstv %s1438
        %v1440 = vmul.f32 %v1437, %v1439
        %v1441 = vmul.f32 %v1440, 1.442695
        %v1442 = vpow.pop %v1441
        %v1443 = vmax.f32 %v1442, 1e-05
        %v1444 = vmin.f32 %v1443, 100000.0
        %v1445 = vmul.f32 %v1338, %v1444
        %v1446 = vsel %vm979, %v1445, -1e+32
        %v1447 = vsel %vm1066, %v1446, -inf
        %1448 = vmax.xlane.f32.xlu0 %v1447
        %v1449 = vpop.xlane.xlu0 %1448
        %v1450 = vsub.f32 %v1446, %v1449
        %v1451 = vmul.f32 %v1450, 1.442695
        %v1452 = vpow.pop %v1451
        %v1453 = vsel %vm1066, %v1452, 0.0
        %1454 = vadd.xlane.f32.xlu0 %v1453
        %v1455 = vpop.xlane.xlu0 %1454
        %v1456 = vrcp.pop %v1455
        %v1457 = vmul.f32 %v1452, %v1456
        %s1458 = scalar_lea.vmem %s728, 8 [#allocation14]
        %1459 = vst.msk [vmem:[%s1458] sm:$0xff] %vm1066, %v1457
        %1461 = vrot.lane.b32.xlu0 %v971, 112
        %v1462 = vpop.permute.xlu0 %1461
        %v1465 = vsel %vm1066, %v1457, 0
        %1467 = vmatprep.subr.mxu0 0.0
        %1468 = vmatpush1.msra.mxu0 %v1462
        %1469 = vmatprep.subr.mxu0 0.0
        %1470 = vmatpush1.msra.mxu0 0.0
        %1471 = vmatprep.subr.mxu0 0.0
        %1472 = vmatpush1.msra.mxu0 0.0
        %1473 = vmatprep.subr.mxu0 0.0
        %1474 = vmatpush1.msra.mxu0 0.0
        %1475 = vmatprep.subr.mxu0 0.0
        %1476 = vmatpush1.msra.mxu0 0.0
        %1477 = vmatprep.subr.mxu0 0.0
        %1478 = vmatpush1.msra.mxu0 0.0
        %1479 = vmatprep.subr.mxu0 0.0
        %1480 = vmatpush1.msra.mxu0 0.0
        %1481 = vmatprep.subr.mxu0 0.0
        %1482 = vmatpush1.msra.mxu0 0.0
        %1483 = vmatprep.subr.mxu0 0.0
        %1484 = vmatpush1.msra.mxu0 0.0
        %1485 = vmatprep.subr.mxu0 0.0
        %1486 = vmatpush1.msra.mxu0 0.0
        %1487 = vmatprep.subr.mxu0 0.0
        %1488 = vmatpush1.msra.mxu0 0.0
        %1489 = vmatprep.subr.mxu0 0.0
        %1490 = vmatpush1.msra.mxu0 0.0
        %1491 = vmatprep.subr.mxu0 0.0
        %1492 = vmatpush1.msra.mxu0 0.0
        %1493 = vmatprep.subr.mxu0 0.0
        %1494 = vmatpush1.msra.mxu0 0.0
        %1495 = vmatprep.subr.mxu0 0.0
        %1496 = vmatpush1.msra.mxu0 0.0
        %1497 = vmatprep.subr.mxu0 0.0
        %1498 = vmatpush1.msra.mxu0 0.0
        %1499 = vmatprep.subr.mxu0 0.0
        %1500 = vmatpush1.msra.mxu0 0.0
        %1501 = vmatprep.subr.mxu0 0.0
        %1502 = vmatpush1.msra.mxu0 0.0
        %1503 = vmatprep.subr.mxu0 0.0
        %1504 = vmatpush1.msra.mxu0 0.0
        %1505 = vmatprep.subr.mxu0 0.0
        %1506 = vmatpush1.msra.mxu0 0.0
        %1507 = vmatprep.subr.mxu0 0.0
        %1508 = vmatpush1.msra.mxu0 0.0
        %1509 = vmatprep.subr.mxu0 0.0
        %1510 = vmatpush1.msra.mxu0 0.0
        %1511 = vmatprep.subr.mxu0 0.0
        %1512 = vmatpush1.msra.mxu0 0.0
        %1513 = vmatprep.subr.mxu0 0.0
        %1514 = vmatpush1.msra.mxu0 0.0
        %1515 = vmatprep.subr.mxu0 0.0
        %1516 = vmatpush1.msra.mxu0 0.0
        %1517 = vmatprep.subr.mxu0 0.0
        %1518 = vmatpush1.msra.mxu0 0.0
        %1519 = vmatprep.subr.mxu0 0.0
        %1520 = vmatpush1.msra.mxu0 0.0
        %1521 = vmatprep.subr.mxu0 0.0
        %1522 = vmatpush1.msra.mxu0 0.0
        %1523 = vmatprep.subr.mxu0 0.0
        %1524 = vmatpush1.msra.mxu0 0.0
        %1525 = vmatprep.subr.mxu0 0.0
        %1526 = vmatpush1.msra.mxu0 0.0
        %1527 = vmatprep.subr.mxu0 0.0
        %1528 = vmatpush1.msra.mxu0 0.0
        %1529 = vmatprep.subr.mxu0 0.0
        %1530 = vmatpush1.msra.mxu0 0.0
        %1531 = vmatprep.mubr.f32.mxu0 0.0
        %1532 = vmatmul.mubr.f32.gmra.mrb[0].mxu0 %v1465
        %v1533 = vpop.f32.mrb[0].mxu0
        %v1534 = vadd.f32 0.0, %v1533
        %v1535 = vpop.f32.mrb[0].mxu0
        %1536 = vdwg.mxu0
        %1538 = vrot.lane.b32.xlu0 %v1534, 16
        %v1539 = vpop.permute.xlu0 %1538
        %vm1541 = vcmask 261248
        %1542 = vst.msk [vmem:[#allocation2] sm:$0xff] %vm1541, %v1539
        %v1543 = vld [vmem:[#allocation2] sm:$0xff]
        %v1544 = vld [vmem:[%s7] sm:$0xff]
        %v1545 = vld [vmem:[%s7 + $0x8] sm:$0xff]
        %v1546 = vld [vmem:[%s7 + $0x10] sm:$0xff]
        %v1547 = vld [vmem:[%s7 + $0x18] sm:$0xff]
        %v1548 = vld [vmem:[%s8] sm:$0x1]
        %v1550 = vlaneseq
        %v1551 = vshrl.u32 %v1550, 7
        %v1552 = vsub.s32 0, %v1551
        %v1553 = vrot.slane %v1548, %v1552
        %v1556 = vsel %vm747, %v1543, 0
        %1558 = vmatprep.subr.mxu0 0.0
        %1559 = vmatpush1.msra.mxu0 %v1544
        %1560 = vmatprep.subr.mxu0 0.0
        %1561 = vmatpush1.msra.mxu0 %v1545
        %1562 = vmatprep.subr.mxu0 0.0
        %1563 = vmatpush1.msra.mxu0 %v1546
        %1564 = vmatprep.subr.mxu0 0.0
        %1565 = vmatpush1.msra.mxu0 %v1547
        %1566 = vmatprep.subr.mxu0 0.0
        %1567 = vmatpush1.msra.mxu0 0.0
        %1568 = vmatprep.subr.mxu0 0.0
        %1569 = vmatpush1.msra.mxu0 0.0
        %1570 = vmatprep.subr.mxu0 0.0
        %1571 = vmatpush1.msra.mxu0 0.0
        %1572 = vmatprep.subr.mxu0 0.0
        %1573 = vmatpush1.msra.mxu0 0.0
        %1574 = vmatprep.subr.mxu0 0.0
        %1575 = vmatpush1.msra.mxu0 0.0
        %1576 = vmatprep.subr.mxu0 0.0
        %1577 = vmatpush1.msra.mxu0 0.0
        %1578 = vmatprep.subr.mxu0 0.0
        %1579 = vmatpush1.msra.mxu0 0.0
        %1580 = vmatprep.subr.mxu0 0.0
        %1581 = vmatpush1.msra.mxu0 0.0
        %1582 = vmatprep.subr.mxu0 0.0
        %1583 = vmatpush1.msra.mxu0 0.0
        %1584 = vmatprep.subr.mxu0 0.0
        %1585 = vmatpush1.msra.mxu0 0.0
        %1586 = vmatprep.subr.mxu0 0.0
        %1587 = vmatpush1.msra.mxu0 0.0
        %1588 = vmatprep.subr.mxu0 0.0
        %1589 = vmatpush1.msra.mxu0 0.0
        %1590 = vmatprep.subr.mxu0 0.0
        %1591 = vmatpush1.msra.mxu0 0.0
        %1592 = vmatprep.subr.mxu0 0.0
        %1593 = vmatpush1.msra.mxu0 0.0
        %1594 = vmatprep.subr.mxu0 0.0
        %1595 = vmatpush1.msra.mxu0 0.0
        %1596 = vmatprep.subr.mxu0 0.0
        %1597 = vmatpush1.msra.mxu0 0.0
        %1598 = vmatprep.subr.mxu0 0.0
        %1599 = vmatpush1.msra.mxu0 0.0
        %1600 = vmatprep.subr.mxu0 0.0
        %1601 = vmatpush1.msra.mxu0 0.0
        %1602 = vmatprep.subr.mxu0 0.0
        %1603 = vmatpush1.msra.mxu0 0.0
        %1604 = vmatprep.subr.mxu0 0.0
        %1605 = vmatpush1.msra.mxu0 0.0
        %1606 = vmatprep.subr.mxu0 0.0
        %1607 = vmatpush1.msra.mxu0 0.0
        %1608 = vmatprep.subr.mxu0 0.0
        %1609 = vmatpush1.msra.mxu0 0.0
        %1610 = vmatprep.subr.mxu0 0.0
        %1611 = vmatpush1.msra.mxu0 0.0
        %1612 = vmatprep.subr.mxu0 0.0
        %1613 = vmatpush1.msra.mxu0 0.0
        %1614 = vmatprep.subr.mxu0 0.0
        %1615 = vmatpush1.msra.mxu0 0.0
        %1616 = vmatprep.subr.mxu0 0.0
        %1617 = vmatpush1.msra.mxu0 0.0
        %1618 = vmatprep.subr.mxu0 0.0
        %1619 = vmatpush1.msra.mxu0 0.0
        %1620 = vmatprep.subr.mxu0 0.0
        %1621 = vmatpush1.msra.mxu0 0.0
        %1622 = vmatprep.mubr.f32.mxu0 0.0
        %1623 = vmatmul.mubr.f32.gmra.mrb[0].mxu0 %v1556
        %v1624 = vpop.f32.mrb[0].mxu0
        %v1625 = vadd.f32 %v1553, %v1624
        %v1626 = vpop.f32.mrb[0].mxu0
        %1627 = vdwg.mxu0
        %v1628 = vadd.f32 %v729, %v1625
        %v1629 = vld [vmem:[%s10] sm:$0x1]
        %v1630 = vld [vmem:[%s11] sm:$0x1]
        %v1631 = vsel %vm747, %v1628, 0.0
        %1632 = vadd.xlane.f32.xlu0 %v1631
        %v1633 = vpop.xlane.xlu0 %1632
        %v1634 = vrcp.pop 32.0
        %v1635 = vmul.f32 %v1633, %v1634
        %v1636 = vsub.f32 %v1628, %v1635
        %v1637 = vmul.f32 %v1636, %v1636
        %v1638 = vsel %vm747, %v1637, 0.0
        %1639 = vadd.xlane.f32.xlu0 %v1638
        %v1640 = vpop.xlane.xlu0 %1639
        %v1641 = vmul.f32 %v1640, %v1634
        %v1642 = vadd.f32 %v1641, 1e-05
        %v1643 = vrsqrt.pop %v1642
        %v1644 = vmul.f32 %v1636, %v1643
        %v1646 = vlaneseq
        %v1647 = vshrl.u32 %v1646, 7
        %v1648 = vsub.s32 0, %v1647
        %v1649 = vrot.slane %v1629, %v1648
        %v1651 = vmul.f32 %v1644, %v1649
        %v1653 = vlaneseq
        %v1654 = vshrl.u32 %v1653, 7
        %v1655 = vsub.s32 0, %v1654
        %v1656 = vrot.slane %v1630, %v1655
        %v1658 = vadd.f32 %v1651, %v1656
        %v1659 = vld [vmem:[#allocation11] sm:$0xff]
        %v1660 = vld [vmem:[#allocation11 + $0x8] sm:$0xff]
        %v1661 = vld [vmem:[#allocation11 + $0x10] sm:$0xff]
        %v1662 = vld [vmem:[#allocation11 + $0x18] sm:$0xff]
        %v1663 = vld [vmem:[%s13] sm:$0x1]
        %v1665 = vlaneseq
        %v1666 = vshrl.u32 %v1665, 7
        %v1667 = vsub.s32 0, %v1666
        %v1668 = vrot.slane %v1663, %v1667
        %v1671 = vsel %vm747, %v1658, 0
        %1673 = vmatprep.subr.mxu0 0.0
        %1674 = vmatpush1.msra.mxu0 %v1659
        %1675 = vmatprep.subr.mxu0 0.0
        %1676 = vmatpush1.msra.mxu0 %v1660
        %1677 = vmatprep.subr.mxu0 0.0
        %1678 = vmatpush1.msra.mxu0 %v1661
        %1679 = vmatprep.subr.mxu0 0.0
        %1680 = vmatpush1.msra.mxu0 %v1662
        %1681 = vmatprep.subr.mxu0 0.0
        %1682 = vmatpush1.msra.mxu0 0.0
        %1683 = vmatprep.subr.mxu0 0.0
        %1684 = vmatpush1.msra.mxu0 0.0
        %1685 = vmatprep.subr.mxu0 0.0
        %1686 = vmatpush1.msra.mxu0 0.0
        %1687 = vmatprep.subr.mxu0 0.0
        %1688 = vmatpush1.msra.mxu0 0.0
        %1689 = vmatprep.subr.mxu0 0.0
        %1690 = vmatpush1.msra.mxu0 0.0
        %1691 = vmatprep.subr.mxu0 0.0
        %1692 = vmatpush1.msra.mxu0 0.0
        %1693 = vmatprep.subr.mxu0 0.0
        %1694 = vmatpush1.msra.mxu0 0.0
        %1695 = vmatprep.subr.mxu0 0.0
        %1696 = vmatpush1.msra.mxu0 0.0
        %1697 = vmatprep.subr.mxu0 0.0
        %1698 = vmatpush1.msra.mxu0 0.0
        %1699 = vmatprep.subr.mxu0 0.0
        %1700 = vmatpush1.msra.mxu0 0.0
        %1701 = vmatprep.subr.mxu0 0.0
        %1702 = vmatpush1.msra.mxu0 0.0
        %1703 = vmatprep.subr.mxu0 0.0
        %1704 = vmatpush1.msra.mxu0 0.0
        %1705 = vmatprep.subr.mxu0 0.0
        %1706 = vmatpush1.msra.mxu0 0.0
        %1707 = vmatprep.subr.mxu0 0.0
        %1708 = vmatpush1.msra.mxu0 0.0
        %1709 = vmatprep.subr.mxu0 0.0
        %1710 = vmatpush1.msra.mxu0 0.0
        %1711 = vmatprep.subr.mxu0 0.0
        %1712 = vmatpush1.msra.mxu0 0.0
        %1713 = vmatprep.subr.mxu0 0.0
        %1714 = vmatpush1.msra.mxu0 0.0
        %1715 = vmatprep.subr.mxu0 0.0
        %1716 = vmatpush1.msra.mxu0 0.0
        %1717 = vmatprep.subr.mxu0 0.0
        %1718 = vmatpush1.msra.mxu0 0.0
        %1719 = vmatprep.subr.mxu0 0.0
        %1720 = vmatpush1.msra.mxu0 0.0
        %1721 = vmatprep.subr.mxu0 0.0
        %1722 = vmatpush1.msra.mxu0 0.0
        %1723 = vmatprep.subr.mxu0 0.0
        %1724 = vmatpush1.msra.mxu0 0.0
        %1725 = vmatprep.subr.mxu0 0.0
        %1726 = vmatpush1.msra.mxu0 0.0
        %1727 = vmatprep.subr.mxu0 0.0
        %1728 = vmatpush1.msra.mxu0 0.0
        %1729 = vmatprep.subr.mxu0 0.0
        %1730 = vmatpush1.msra.mxu0 0.0
        %1731 = vmatprep.subr.mxu0 0.0
        %1732 = vmatpush1.msra.mxu0 0.0
        %1733 = vmatprep.subr.mxu0 0.0
        %1734 = vmatpush1.msra.mxu0 0.0
        %1735 = vmatprep.subr.mxu0 0.0
        %1736 = vmatpush1.msra.mxu0 0.0
        %1737 = vmatprep.mubr.f32.mxu0 0.0
        %1738 = vmatmul.mubr.f32.gmra.mrb[0].mxu0 %v1671
        %v1739 = vpop.f32.mrb[0].mxu0
        %v1740 = vadd.f32 %v1668, %v1739
        %v1741 = vpop.f32.mrb[0].mxu0
        %1742 = vdwg.mxu0
        %v1743 = vmul.f32 %v1740, 0.5
        %v1744 = vmul.f32 %v1740, 0.044715
        %v1745 = vmul.f32 %v1744, %v1740
        %v1746 = vmul.f32 %v1745, %v1740
        %v1747 = vadd.f32 %v1740, %v1746
        %v1748 = vmul.f32 %v1747, 0.7978846
        %v1749 = vtanh.pop %v1748
        %v1750 = vadd.f32 %v1749, 1.0
        %v1751 = vmul.f32 %v1743, %v1750
        %v1752 = vld [vmem:[%s14] sm:$0xff]
        %v1753 = vld [vmem:[%s14 + $0x8] sm:$0xff]
        %v1754 = vld [vmem:[%s14 + $0x10] sm:$0xff]
        %v1755 = vld [vmem:[%s14 + $0x18] sm:$0xff]
        %v1756 = vld [vmem:[%s14 + $0x20] sm:$0xff]
        %v1757 = vld [vmem:[%s14 + $0x28] sm:$0xff]
        %v1758 = vld [vmem:[%s14 + $0x30] sm:$0xff]
        %v1759 = vld [vmem:[%s14 + $0x38] sm:$0xff]
        %v1760 = vld [vmem:[%s15] sm:$0x1]
        %v1762 = vlaneseq
        %v1763 = vshrl.u32 %v1762, 7
        %v1764 = vsub.s32 0, %v1763
        %v1765 = vrot.slane %v1760, %v1764
        %vm1767 = vcmask 523264
        %v1769 = vsel %vm1767, %v1751, 0
        %1771 = vmatprep.subr.mxu0 0.0
        %1772 = vmatpush1.msra.mxu0 %v1752
        %1773 = vmatprep.subr.mxu0 0.0
        %1774 = vmatpush1.msra.mxu0 %v1753
        %1775 = vmatprep.subr.mxu0 0.0
        %1776 = vmatpush1.msra.mxu0 %v1754
        %1777 = vmatprep.subr.mxu0 0.0
        %1778 = vmatpush1.msra.mxu0 %v1755
        %1779 = vmatprep.subr.mxu0 0.0
        %1780 = vmatpush1.msra.mxu0 %v1756
        %1781 = vmatprep.subr.mxu0 0.0
        %1782 = vmatpush1.msra.mxu0 %v1757
        %1783 = vmatprep.subr.mxu0 0.0
        %1784 = vmatpush1.msra.mxu0 %v1758
        %1785 = vmatprep.subr.mxu0 0.0
        %1786 = vmatpush1.msra.mxu0 %v1759
        %1787 = vmatprep.subr.mxu0 0.0
        %1788 = vmatpush1.msra.mxu0 0.0
        %1789 = vmatprep.subr.mxu0 0.0
        %1790 = vmatpush1.msra.mxu0 0.0
        %1791 = vmatprep.subr.mxu0 0.0
        %1792 = vmatpush1.msra.mxu0 0.0
        %1793 = vmatprep.subr.mxu0 0.0
        %1794 = vmatpush1.msra.mxu0 0.0
        %1795 = vmatprep.subr.mxu0 0.0
        %1796 = vmatpush1.msra.mxu0 0.0
        %1797 = vmatprep.subr.mxu0 0.0
        %1798 = vmatpush1.msra.mxu0 0.0
        %1799 = vmatprep.subr.mxu0 0.0
        %1800 = vmatpush1.msra.mxu0 0.0
        %1801 = vmatprep.subr.mxu0 0.0
        %1802 = vmatpush1.msra.mxu0 0.0
        %1803 = vmatprep.subr.mxu0 0.0
        %1804 = vmatpush1.msra.mxu0 0.0
        %1805 = vmatprep.subr.mxu0 0.0
        %1806 = vmatpush1.msra.mxu0 0.0
        %1807 = vmatprep.subr.mxu0 0.0
        %1808 = vmatpush1.msra.mxu0 0.0
        %1809 = vmatprep.subr.mxu0 0.0
        %1810 = vmatpush1.msra.mxu0 0.0
        %1811 = vmatprep.subr.mxu0 0.0
        %1812 = vmatpush1.msra.mxu0 0.0
        %1813 = vmatprep.subr.mxu0 0.0
        %1814 = vmatpush1.msra.mxu0 0.0
        %1815 = vmatprep.subr.mxu0 0.0
        %1816 = vmatpush1.msra.mxu0 0.0
        %1817 = vmatprep.subr.mxu0 0.0
        %1818 = vmatpush1.msra.mxu0 0.0
        %1819 = vmatprep.subr.mxu0 0.0
        %1820 = vmatpush1.msra.mxu0 0.0
        %1821 = vmatprep.subr.mxu0 0.0
        %1822 = vmatpush1.msra.mxu0 0.0
        %1823 = vmatprep.subr.mxu0 0.0
        %1824 = vmatpush1.msra.mxu0 0.0
        %1825 = vmatprep.subr.mxu0 0.0
        %1826 = vmatpush1.msra.mxu0 0.0
        %1827 = vmatprep.subr.mxu0 0.0
        %1828 = vmatpush1.msra.mxu0 0.0
        %1829 = vmatprep.subr.mxu0 0.0
        %1830 = vmatpush1.msra.mxu0 0.0
        %1831 = vmatprep.subr.mxu0 0.0
        %1832 = vmatpush1.msra.mxu0 0.0
        %1833 = vmatprep.subr.mxu0 0.0
        %1834 = vmatpush1.msra.mxu0 0.0
        %1835 = vmatprep.mubr.f32.mxu0 0.0
        %1836 = vmatmul.mubr.f32.gmra.mrb[0].mxu0 %v1769
        %v1837 = vpop.f32.mrb[0].mxu0
        %v1838 = vadd.f32 %v1765, %v1837
        %v1839 = vpop.f32.mrb[0].mxu0
        %1840 = vdwg.mxu0
        %v1841 = vadd.f32 %v1658, %v1838
        %v1842 = vld [vmem:[%s16] sm:$0x1]
        %v1843 = vld [vmem:[%s17] sm:$0x1]
        %v1844 = vsel %vm747, %v1841, 0.0
        %1845 = vadd.xlane.f32.xlu0 %v1844
        %v1846 = vpop.xlane.xlu0 %1845
        %v1847 = vmul.f32 %v1846, %v1634
        %v1848 = vsub.f32 %v1841, %v1847
        %v1849 = vmul.f32 %v1848, %v1848
        %v1850 = vsel %vm747, %v1849, 0.0
        %1851 = vadd.xlane.f32.xlu0 %v1850
        %v1852 = vpop.xlane.xlu0 %1851
        %v1853 = vmul.f32 %v1852, %v1634
        %v1854 = vadd.f32 %v1853, 1e-05
        %v1855 = vrsqrt.pop %v1854
        %v1856 = vmul.f32 %v1848, %v1855
        %v1858 = vlaneseq
        %v1859 = vshrl.u32 %v1858, 7
        %v1860 = vsub.s32 0, %v1859
        %v1861 = vrot.slane %v1842, %v1860
        %v1863 = vmul.f32 %v1856, %v1861
        %v1865 = vlaneseq
        %v1866 = vshrl.u32 %v1865, 7
        %v1867 = vsub.s32 0, %v1866
        %v1868 = vrot.slane %v1843, %v1867
        %v1870 = vadd.f32 %v1863, %v1868
        %1871 = vst.msk [vmem:[%s721] sm:$0xff] %vm747, %v1870
        %s1872 = sand.u32 %s446, 1
        %s1873 = scalar_lea.sflag [#allocation5], %s1872
        %s1874 = sand.u32 %s446, 1
        %s1875 = smul.addr %s1874, 8
        %s1876 = scalar_lea.vmem [#allocation13], %s1875
        %s1877 = sand.u32 %s472, 1
        %s1878 = scalar_lea.sflag [#allocation15], %s1877
        %s1879 = sand.u32 %s472, 1
        %s1880 = smul.addr %s1879, 16
        %s1881 = scalar_lea.vmem [#allocation14], %s1880
        // Predicated region
        $region113: #{tpu_custom_call.1} parent=91 // pred_check
          %p1882 = pneg %p456
        $region114: #{tpu_custom_call.1} parent=91 // pred_check_branch
          %1884 = sbr.rel (%p1882) target = $region116
        $region115: #{tpu_custom_call.1} parent=91 // pred_region
          %s1886 = ssub.s32 128, 128
          %1887 = vsyncadd %s1873, %s1886
          %s1888 = smul.addr %s45, 128
          %s1889 = scalar_lea.hbm %s18, %s1888
          %s1891 = sshll.u32 %s1876, 4
          %s1892 = int_to_ptr.vmem [resolvable:$true] %s1891
          %1894 = dma.vmem_to_hbm [thread:$0]  %s1892, 128, %s1889, %s1873
        $region116: #{tpu_custom_call.1} parent=91 // pred_fallthru
          _
        // Predicated region
        $region117: #{tpu_custom_call.1} parent=91 // pred_check
          %p1895 = pneg %p482
        $region118: #{tpu_custom_call.1} parent=91 // pred_check_branch
          %1897 = sbr.rel (%p1895) target = $region120
        $region119: #{tpu_custom_call.1} parent=91 // pred_region
          %s1899 = ssub.s32 256, 256
          %1900 = vsyncadd %s1878, %s1899
          %s1901 = smul.addr %s45, 2
          %s1902 = smul.addr %s1901, 128
          %s1903 = scalar_lea.hbm %s19, %s1902
          %s1904 = sshll.u32 %s1881, 4
          %s1905 = int_to_ptr.vmem [resolvable:$true] %s1904
          %1910 = dma.vmem_to_hbm [thread:$0]  %s1905, 256, %s1903, %s1878, 128, 128, 8
        $region120: #{tpu_custom_call.1} parent=91 // pred_fallthru
          _
      $region92: #{tpu_custom_call.1} parent=5 // pred_fallthru
        _
      %p1911 = scmp.le.s32.totalorder 2, %s40
      // Predicated region
      $region121: #{tpu_custom_call.1} parent=5 // pred_check
        %p1912 = pneg %p1911
      $region122: #{tpu_custom_call.1} parent=5 // pred_check_branch
        %1914 = sbr.rel (%p1912) target = $region124
      $region123: #{tpu_custom_call.1} parent=5 // pred_region
        %s1915 = ssub.s32 %s40, 2
        // Predicated region
        $region125: #{tpu_custom_call.1} parent=123 // pred_check
          %p1916 = pneg %p462
        $region126: #{tpu_custom_call.1} parent=123 // pred_check_branch
          %1918 = sbr.rel (%p1916) target = $region128
        $region127: #{tpu_custom_call.1} parent=123 // pred_region
          %s1919 = sand.u32 %s447, 1
          %s1920 = scalar_lea.sflag [#allocation5], %s1919
          %s1921 = sand.u32 %s447, 1
          %s1922 = smul.addr %s1921, 8
          %s1923 = scalar_lea.vmem [#allocation13], %s1922
          %1924 = dma.done %s1920, 128
        $region128: #{tpu_custom_call.1} parent=123 // pred_fallthru
          _
        // Predicated region
        $region129: #{tpu_custom_call.1} parent=123 // pred_check
          %p1925 = pneg %p488
        $region130: #{tpu_custom_call.1} parent=123 // pred_check_branch
          %1927 = sbr.rel (%p1925) target = $region132
        $region131: #{tpu_custom_call.1} parent=123 // pred_region
          %s1928 = sand.u32 %s473, 1
          %s1929 = scalar_lea.sflag [#allocation15], %s1928
          %s1930 = sand.u32 %s473, 1
          %s1931 = smul.addr %s1930, 16
          %s1932 = scalar_lea.vmem [#allocation14], %s1931
          %1933 = dma.done %s1929, 256
        $region132: #{tpu_custom_call.1} parent=123 // pred_fallthru
          _
      $region124: #{tpu_custom_call.1} parent=5 // pred_fallthru
        _
    $region6: #{tpu_custom_call.1} parent=1 // loop_footer
      %s44 = sadd.s32 1, %s40
    $region7: #{tpu_custom_call.1} parent=1 // loop_footer_branch
      %39 = sbr.rel target = $region3
    $region8: #{tpu_custom_call.1} parent=1 // loop_exit
      _
    %1934 = vsyncpa [#allocation4], 1
    %s1935 = scalar_lea.sflag [#allocation4], 1
    %1936 = vsyncpa %s1935, 1
    %1937 = vsyncpa [#allocation8], 1
    %s1938 = scalar_lea.sflag [#allocation8], 1
    %1939 = vsyncpa %s1938, 1
    %1940 = vsyncpa [#allocation12], 1
    %1941 = vsyncpa [#allocation5], 1
    %s1942 = scalar_lea.sflag [#allocation5], 1
    %1943 = vsyncpa %s1942, 1
    %1944 = vsyncpa [#allocation15], 1
    %s1945 = scalar_lea.sflag [#allocation15], 1
    %1946 = vsyncpa %s1945, 1
    %1947 = vsyncpa [#allocation6], 1
    %s1948 = scalar_lea.sflag [#allocation6], 1
    %1949 = vsyncpa %s1948, 1

</llo_original>
